<compile_context>
chip_gen: v7x
topology: tpu7x:2x2x1
jax: 0.10.0
libtpu: 0.0.40
codegen_flags: <defaults>
</compile_context>

<pallas_src>
import functools

import jax
import jax.numpy as jnp
from jax import lax
from jax.experimental import pallas as pl
from jax.experimental.pallas import tpu as pltpu


VMEM_LIMIT_BYTES = 32 * 1024 * 1024   # raises v5e's 16 MiB default; == default on v6e/v7x


def _pad_lanes(c):
    """Mosaic pads the last (lane) dim of VMEM buffers to 128."""
    return ((c + 127) // 128) * 128


def _pick_tile(total, fits_fn):
    """Largest divisor of `total` that fits the VMEM budget, preferring >=2 tiles
    (pipeline depth / v7x megacore balance)."""
    divs = [t for t in range(1, total + 1) if total % t == 0]
    fits = [t for t in divs if fits_fn(t)]
    if not fits:
        return 1
    multi = [t for t in fits if total // t >= 2]
    return max(multi) if multi else max(fits)


# ---------------------------------------------------------------------------
# Kernel 1: ConvTranspose2d(kernel=2, stride=2) + bias.
#   out[n, 2i+a, 2j+b, oc] = sum_c x1[n,i,j,c] * Wup[c,oc,a,b] + bup[oc]
# x1 arrives bf16 and pre-flattened to (N, H*W, Cin): one MXU matmul per row tile.
# Output layout (N, H, 2, W, 2*Cup): the 2x2 interleave is a free reshape in the wrapper.
# ---------------------------------------------------------------------------
def _upconv_kernel(x_ref, w_ref, b_ref, o_ref):
    tp1, w, cup2 = o_ref.shape[1], o_ref.shape[3], o_ref.shape[4]
    acc = jnp.dot(x_ref[0], w_ref[...],                      # bf16 MXU, f32 accumulate
                  preferred_element_type=jnp.float32)
    acc = acc + b_ref[...]                                   # (tp1*W, 4*Cup) f32
    y3 = acc.reshape(tp1, w, 2 * cup2)
    for a in range(2):                                       # row tap a -> lane slice (b, oc)
        o_ref[0, :, a, :, :] = y3[:, :, a * cup2:(a + 1) * cup2].astype(o_ref.dtype)


def upconv2x2(x1_nhwc_bf16, w_mat_bf16, b_mat_f32, *, cup, row_tile):
    N, H, W, Cin = x1_nhwc_bf16.shape
    tp1 = row_tile
    x1r = x1_nhwc_bf16.reshape(N, H * W, Cin)                # free row-major reshape (XLA)
    y6 = pl.pallas_call(
        _upconv_kernel,
        out_shape=jax.ShapeDtypeStruct((N, H, 2, W, 2 * cup), jnp.bfloat16),
        grid_spec=pltpu.PrefetchScalarGridSpec(
            num_scalar_prefetch=0,
            grid=(N, H // tp1),
            in_specs=[
                pl.BlockSpec((1, tp1 * W, Cin), lambda n, t: (n, t, 0)),
                pl.BlockSpec((Cin, 4 * cup), lambda n, t: (0, 0)),
                pl.BlockSpec((1, 4 * cup), lambda n, t: (0, 0)),
            ],
            out_specs=pl.BlockSpec((1, tp1, 2, W, 2 * cup),
                                   lambda n, t: (n, t, 0, 0, 0)),
        ),
        compiler_params=pltpu.CompilerParams(
            dimension_semantics=("parallel", "parallel"),
            vmem_limit_bytes=VMEM_LIMIT_BYTES),
    )(x1r, w_mat_bf16, b_mat_f32)
    # Free (row-major adjacent-dim) reshape -> interleaved NHWC upconv output.
    return y6.reshape(N, H, 2, W, 2, cup).reshape(N, 2 * H, 2 * W, cup)


def _up_row_tile(H, W, Cin, Cup, budget):
    def fits(tp1):
        blocks = 2 * (tp1 * W * _pad_lanes(Cin) * 2
                      + tp1 * 2 * W * _pad_lanes(2 * Cup) * 2)   # double-buffered in/out
        acc = tp1 * W * _pad_lanes(4 * Cup) * 4
        wgt = Cin * _pad_lanes(4 * Cup) * 2 + _pad_lanes(4 * Cup) * 4
        return blocks + acc + wgt <= budget
    return _pick_tile(H, fits)


# ---------------------------------------------------------------------------
# Kernel 2: fused [implicit channel concat] + Conv2d(3x3, pad=1) + bias + ReLU.
# Per (batch, row-tile): assemble ONE zero-padded, halo'd bf16 window holding the
# concatenated (y | x2) channels, build the 9-tap im2col window in VMEM and run a
# single MXU matmul with K = 9*Cmid (taps folded into the contraction dim).
# ---------------------------------------------------------------------------
def _conv3x3_kernel(yc_ref, yh_ref, xc_ref, xh_ref, w_ref, b_ref, o_ref, buf,
                    *, tpo, wo, cout):
    bf16 = jnp.bfloat16
    cmid = buf.shape[-1]

    # Zero the conv padding column regions every step (scratch persists across steps).
    buf[:, 0:8, :] = jnp.zeros((tpo + 2, 8, cmid), bf16)
    buf[:, 8 + wo:16 + wo, :] = jnp.zeros((tpo + 2, 8, cmid), bf16)

    # Assemble the halo'd window; the channel concat (y | x2) happens at value level so the
    # concatenated conv input never exists in HBM.  Boundary halo rows arrive as zeros.
    buf[1:1 + tpo, 8:8 + wo, :] = jnp.concatenate([yc_ref[0], xc_ref[0]], axis=-1)
    buf[0:1, 8:8 + wo, :] = jnp.concatenate(
        [yh_ref[0, 0, 0:1], xh_ref[0, 0, 0:1]], axis=-1)
    buf[1 + tpo:2 + tpo, 8:8 + wo, :] = jnp.concatenate(
        [yh_ref[0, 0, 1:2], xh_ref[0, 0, 1:2]], axis=-1)

    # im2col over the 9 taps, folded into the matmul K dimension -> ONE MXU matmul.
    pieces = [buf[ky:ky + tpo, 7 + kx:7 + kx + wo, :]
              for ky in range(3) for kx in range(3)]
    win = jnp.concatenate(pieces, axis=-1).reshape(tpo * wo, 9 * cmid)   # bf16

    acc = jnp.dot(win, w_ref[...], preferred_element_type=jnp.float32)  # (tpo*wo, Cout)
    out = jnp.maximum(acc + b_ref[...], 0.0)
    o_ref[0] = out.reshape(tpo, wo, cout).astype(o_ref.dtype)


def conv3x3_relu(y_nhwc, x2_nhwc, w_mat, b_mat, *, row_tile):
    N, Ho, Wo, Cy = y_nhwc.shape
    Cx = x2_nhwc.shape[-1]
    Cmid = Cy + Cx
    Cout = w_mat.shape[-1]
    tpo = row_tile
    nt = Ho // tpo

    def build_halo(z, tile):
        # halo[:, t, 0] = row t*tile - 1 (zeros for t=0); halo[:, t, 1] = row (t+1)*tile
        # (zeros for the last tile)  -> these zero rows ARE the conv's zero padding.
        C = z.shape[-1]
        first = z[:, ::tile, :, :]
        last = z[:, tile - 1::tile, :, :]
        zero = jnp.zeros((N, 1, Wo, C), z.dtype)
        top = jnp.concatenate([zero, last[:, :-1]], axis=1)
        bot = jnp.concatenate([first[:, 1:], zero], axis=1)
        return jnp.stack([top, bot], axis=2)                 # (N, nt, 2, Wo, C)

    yh = build_halo(y_nhwc, tpo)
    xh = build_halo(x2_nhwc, tpo)

    return pl.pallas_call(
        functools.partial(_conv3x3_kernel, tpo=tpo, wo=Wo, cout=Cout),
        out_shape=jax.ShapeDtypeStruct((N, Ho, Wo, Cout), jnp.float32),
        grid_spec=pltpu.PrefetchScalarGridSpec(
            num_scalar_prefetch=0,
            grid=(N, nt),
            in_specs=[
                pl.BlockSpec((1, tpo, Wo, Cy), lambda n, t: (n, t, 0, 0)),
                pl.BlockSpec((1, 1, 2, Wo, Cy), lambda n, t: (n, t, 0, 0, 0)),
                pl.BlockSpec((1, tpo, Wo, Cx), lambda n, t: (n, t, 0, 0)),
                pl.BlockSpec((1, 1, 2, Wo, Cx), lambda n, t: (n, t, 0, 0, 0)),
                pl.BlockSpec((9 * Cmid, Cout), lambda n, t: (0, 0)),
                pl.BlockSpec((1, Cout), lambda n, t: (0, 0)),
            ],
            out_specs=pl.BlockSpec((1, tpo, Wo, Cout), lambda n, t: (n, t, 0, 0)),
            scratch_shapes=[
                pltpu.VMEM((tpo + 2, Wo + 16, Cmid), jnp.bfloat16),   # merged bf16 halo buf
            ],
        ),
        compiler_params=pltpu.CompilerParams(
            dimension_semantics=("parallel", "parallel"),
            vmem_limit_bytes=VMEM_LIMIT_BYTES),
    )(y_nhwc, yh, x2_nhwc, xh, w_mat, b_mat)


def _conv_row_tile(Ho, Wo, Cy, Cx, Cout, budget):
    """Lane-padding-aware VMEM accounting: double-buffered blocks + merged bf16 scratch
    + im2col window + f32 accumulator + weights."""
    cmid = Cy + Cx

    def fits(tpo):
        blocks = 2 * (tpo * Wo * _pad_lanes(Cy) * 2
                      + tpo * Wo * _pad_lanes(Cx) * 2
                      + 2 * Wo * _pad_lanes(Cy) * 2
                      + 2 * Wo * _pad_lanes(Cx) * 2
                      + tpo * Wo * _pad_lanes(Cout) * 4)
        scratch = (tpo + 2) * (Wo + 16) * _pad_lanes(cmid) * 2
        win = tpo * Wo * _pad_lanes(9 * cmid) * 2            # im2col value (vregs/VMEM)
        acc = tpo * Wo * _pad_lanes(Cout) * 4
        wgt = 9 * cmid * _pad_lanes(Cout) * 2 + _pad_lanes(Cout) * 4
        return blocks + scratch + win + acc + wgt <= budget

    return _pick_tile(Ho, fits)


# ---------------------------------------------------------------------------
# Decoder forward / params / reference
# ---------------------------------------------------------------------------
def init_decoder_params(key, in_channels, middle_channels, out_channels):
    k1, k2, k3, k4 = jax.random.split(key, 4)
    return dict(
        # PyTorch ConvTranspose2d weight layout: (Cin, Cout, kH, kW)
        up_w=jax.random.normal(k1, (in_channels, out_channels, 2, 2), jnp.float32) * 0.1,
        up_b=jax.random.normal(k2, (out_channels,), jnp.float32) * 0.1,
        # PyTorch Conv2d weight layout: (Cout, Cin, kH, kW)
        conv_w=jax.random.normal(k3, (out_channels, middle_channels, 3, 3), jnp.float32) * 0.1,
        conv_b=jax.random.normal(k4, (out_channels,), jnp.float32) * 0.1,
    )


def decoder_forward(params, x1_nchw, x2_nchw, *, vmem_budget=16 * 1024 * 1024):
    N, Cin, H, W = x1_nchw.shape
    up_w, up_b = params["up_w"], params["up_b"]
    conv_w, conv_b = params["conv_w"], params["conv_b"]
    Cup = up_w.shape[1]
    Cout, Cmid = conv_w.shape[0], conv_w.shape[1]
    C2 = Cmid - Cup
    Ho, Wo = 2 * H, 2 * W
    assert x2_nchw.shape[1] == C2
    assert W % 8 == 0, "TODO(synk): widths not a multiple of 8 need padded handling"

    # --- parameter prep (tiny): bf16 MXU weights, f32 biases ---
    w_up_mat = jnp.transpose(up_w, (0, 2, 3, 1)).reshape(Cin, 4 * Cup).astype(jnp.bfloat16)
    b_up = jnp.tile(up_b, 4).reshape(1, 4 * Cup).astype(jnp.float32)
    # single merged conv weight: (ky, kx, [y|x2] channels, Cout) -> (9*Cmid, Cout)
    w_c_mat = (jnp.transpose(conv_w, (2, 3, 1, 0))
               .reshape(9 * Cmid, Cout).astype(jnp.bfloat16))
    b_c = conv_b.reshape(1, Cout).astype(jnp.float32)

    # --- ConvTranspose2d(k=2, s=2): Pallas kernel 1 (interleave is a free reshape) ---
    x1 = jnp.transpose(x1_nchw, (0, 2, 3, 1)).astype(jnp.bfloat16)   # NHWC bf16 (tiny)
    tp1 = _up_row_tile(H, W, Cin, Cup, vmem_budget)
    y = upconv2x2(x1, w_up_mat, b_up, cup=Cup, row_tile=tp1)         # (N,Ho,Wo,Cup) bf16

    # --- ReplicationPad2d(padding=(num, 0, 0, num)) on x2 (edge pad or crop) ---
    x2 = jnp.transpose(x2_nchw, (0, 2, 3, 1))                        # NHWC
    num = Wo - x2.shape[2]
    if num > 0:
        x2 = jnp.pad(x2, ((0, 0), (0, num), (num, 0), (0, 0)), mode="edge")
    elif num < 0:  # negative padding == cropping (left columns, bottom rows)
        x2 = x2[:, :x2.shape[1] + num, -num:, :]
    x2 = x2.astype(jnp.bfloat16)

    # --- fused concat + 3x3 conv + bias + ReLU: Pallas kernel 2 ---
    tpo = _conv_row_tile(Ho, Wo, Cup, C2, Cout, vmem_budget)
    out = conv3x3_relu(y, x2, w_c_mat, b_c, row_tile=tpo)            # (N,Ho,Wo,Cout) f32
    return jnp.transpose(out, (0, 3, 1, 2))                          # back to NCHW


def decoder_reference(params, x1_nchw, x2_nchw):
    """Pure-JAX (lax.conv, f32) reference for correctness checking."""
    x1 = jnp.transpose(x1_nchw, (0, 2, 3, 1))
    x2 = jnp.transpose(x2_nchw, (0, 2, 3, 1))
    up_w, up_b = params["up_w"], params["up_b"]
    # ConvTranspose2d(k=2, s=2, p=0) == conv with lhs_dilation=2, pad=(1,1), flipped kernel
    w_hwio = jnp.transpose(up_w, (2, 3, 0, 1))[::-1, ::-1]
    y = lax.conv_general_dilated(
        x1, w_hwio, window_strides=(1, 1), padding=((1, 1), (1, 1)),
        lhs_dilation=(2, 2), dimension_numbers=("NHWC", "HWIO", "NHWC")) + up_b
    num = y.shape[2] - x2.shape[2]
    if num > 0:
        x2 = jnp.pad(x2, ((0, 0), (0, num), (num, 0), (0, 0)), mode="edge")
    elif num < 0:
        x2 = x2[:, :x2.shape[1] + num, -num:, :]
    xc = jnp.concatenate([y, x2], axis=-1)
    cw_hwio = jnp.transpose(params["conv_w"], (2, 3, 1, 0))
    out = lax.conv_general_dilated(
        xc, cw_hwio, window_strides=(1, 1), padding="SAME",
        dimension_numbers=("NHWC", "HWIO", "NHWC")) + params["conv_b"]
    out = jnp.maximum(out, 0.0)
    return jnp.transpose(out, (0, 3, 1, 2))


if __name__ == "__main__":
    key = jax.random.PRNGKey(0)
    in_channels, middle_channels, out_channels = 4, 8, 4
    kp, kx1, kx2 = jax.random.split(key, 3)
    params = init_decoder_params(kp, in_channels, middle_channels, out_channels)

    # x1: low-res features to upsample; x2: skip connection (NCHW, PyTorch convention).
    # x2 is 14x14 while the upsampled map is 16x16 -> exercises the ReplicationPad2d branch.
    x1 = jax.random.normal(kx1, (2, in_channels, 8, 8), jnp.float32)
    x2 = jax.random.normal(kx2, (2, middle_channels - out_channels, 14, 14), jnp.float32)

    fwd = jax.jit(decoder_forward)
    out = fwd(params, x1, x2)
    jax.block_until_ready(out)

    ref = decoder_reference(params, x1, x2)
    assert out.shape == (2, out_channels, 16, 16), out.shape
    max_err = float(jnp.max(jnp.abs(out - ref)))
    # bf16 MXU inputs / bf16 y in HBM with f32 accumulation vs an f32 reference.
    assert jnp.allclose(out, ref, atol=6e-2, rtol=6e-2), max_err
    print("KERNEL_OK")
</pallas_src>

<mosaic_0001>
module attributes {stable_mosaic.version = 11 : i64} {
  func.func @_upconv_kernel(%arg0: i32, %arg1: i32, %arg2: memref<1x32x4xbf16, #tpu.memory_space<vmem>>, %arg3: memref<4x16xbf16, #tpu.memory_space<vmem>>, %arg4: memref<1x16xf32, #tpu.memory_space<vmem>>, %arg5: memref<1x4x2x8x8xbf16, #tpu.memory_space<vmem>>) attributes {dimension_semantics = [#tpu.dimension_semantics<parallel>, #tpu.dimension_semantics<parallel>], iteration_bounds = array<i64: 2, 2>, scalar_prefetch = 0 : i64, scratch_operands = 0 : i64, tpu.core_type = #tpu.core_type<tc>, window_params = [{transform_indices = @transform_0, window_bounds = array<i64: 1, 32, 4>}, {pipeline_mode = #tpu.pipeline_mode<synchronous>, transform_indices = @transform_1, window_bounds = array<i64: 4, 16>}, {pipeline_mode = #tpu.pipeline_mode<synchronous>, transform_indices = @transform_2, window_bounds = array<i64: 1, 16>}, {transform_indices = @transform_3, window_bounds = array<i64: 1, 4, 2, 8, 8>}]} {
    %c0 = arith.constant 0 : index
    %c0_0 = arith.constant 0 : index
    %c0_1 = arith.constant 0 : index
    %0 = vector.load %arg2[%c0, %c0_0, %c0_1] : memref<1x32x4xbf16, #tpu.memory_space<vmem>>, vector<1x32x4xbf16>
    %1 = vector.shape_cast %0 : vector<1x32x4xbf16> to vector<32x4xbf16>
    %c0_2 = arith.constant 0 : index
    %c0_3 = arith.constant 0 : index
    %2 = vector.load %arg3[%c0_2, %c0_3] : memref<4x16xbf16, #tpu.memory_space<vmem>>, vector<4x16xbf16>
    %cst = arith.constant dense<0.000000e+00> : vector<32x16xf32>
    %3 = tpu.matmul %1, %2, %cst {dimension_numbers = #tpu.dot_dimension_numbers<[1], [0], [0], [1], [0, 0, 1, 1], [], []>} : vector<32x4xbf16>, vector<4x16xbf16>, vector<32x16xf32> -> vector<32x16xf32>
    %c0_4 = arith.constant 0 : index
    %c0_5 = arith.constant 0 : index
    %4 = vector.load %arg4[%c0_4, %c0_5] : memref<1x16xf32, #tpu.memory_space<vmem>>, vector<1x16xf32>
    %5 = vector.broadcast %4 : vector<1x16xf32> to vector<32x16xf32>
    %6 = arith.addf %3, %5 : vector<32x16xf32>
    %7 = vector.shape_cast %6 : vector<32x16xf32> to vector<4x8x16xf32>
    %8 = vector.extract_strided_slice %7 {offsets = [0, 0, 0], sizes = [4, 8, 8], strides = [1, 1, 1]} : vector<4x8x16xf32> to vector<4x8x8xf32>
    %9 = arith.truncf %8 : vector<4x8x8xf32> to vector<4x8x8xbf16>
    %c0_6 = arith.constant 0 : index
    %c0_7 = arith.constant 0 : index
    %c0_8 = arith.constant 0 : index
    %c0_9 = arith.constant 0 : index
    %c0_10 = arith.constant 0 : index
    %10 = vector.load %arg5[%c0_6, %c0_7, %c0_8, %c0_9, %c0_10] : memref<1x4x2x8x8xbf16, #tpu.memory_space<vmem>>, vector<1x4x1x8x8xbf16>
    %11 = vector.shape_cast %10 : vector<1x4x1x8x8xbf16> to vector<4x8x8xbf16>
    %12 = vector.shape_cast %9 : vector<4x8x8xbf16> to vector<1x4x1x8x8xbf16>
    tpu.vector_store %arg5[%c0_6, %c0_7, %c0_8, %c0_9, %c0_10], %12 {strides = array<i32>} : memref<1x4x2x8x8xbf16, #tpu.memory_space<vmem>>, vector<1x4x1x8x8xbf16>,
    %13 = vector.extract_strided_slice %7 {offsets = [0, 0, 8], sizes = [4, 8, 8], strides = [1, 1, 1]} : vector<4x8x16xf32> to vector<4x8x8xf32>
    %14 = arith.truncf %13 : vector<4x8x8xf32> to vector<4x8x8xbf16>
    %c0_11 = arith.constant 0 : index
    %c0_12 = arith.constant 0 : index
    %c1 = arith.constant 1 : index
    %c0_13 = arith.constant 0 : index
    %c0_14 = arith.constant 0 : index
    %15 = vector.load %arg5[%c0_11, %c0_12, %c1, %c0_13, %c0_14] : memref<1x4x2x8x8xbf16, #tpu.memory_space<vmem>>, vector<1x4x1x8x8xbf16>
    %16 = vector.shape_cast %15 : vector<1x4x1x8x8xbf16> to vector<4x8x8xbf16>
    %17 = vector.shape_cast %14 : vector<4x8x8xbf16> to vector<1x4x1x8x8xbf16>
    tpu.vector_store %arg5[%c0_11, %c0_12, %c1, %c0_13, %c0_14], %17 {strides = array<i32>} : memref<1x4x2x8x8xbf16, #tpu.memory_space<vmem>>, vector<1x4x1x8x8xbf16>,
    return
  }
  func.func @transform_0(%arg0: i32, %arg1: i32) -> (i32, i32, i32) {
    %c0_i32 = arith.constant 0 : i32
    %c0_i32_0 = arith.constant 0 : i32
    return %arg0, %arg1, %c0_i32 : i32, i32, i32
  }
  func.func @transform_1(%arg0: i32, %arg1: i32) -> (i32, i32) {
    %c0_i32 = arith.constant 0 : i32
    %c0_i32_0 = arith.constant 0 : i32
    %c0_i32_1 = arith.constant 0 : i32
    return %c0_i32, %c0_i32_0 : i32, i32
  }
  func.func @transform_2(%arg0: i32, %arg1: i32) -> (i32, i32) {
    %c0_i32 = arith.constant 0 : i32
    %c0_i32_0 = arith.constant 0 : i32
    %c0_i32_1 = arith.constant 0 : i32
    return %c0_i32, %c0_i32_0 : i32, i32
  }
  func.func @transform_3(%arg0: i32, %arg1: i32) -> (i32, i32, i32, i32, i32) {
    %c0_i32 = arith.constant 0 : i32
    %c0_i32_0 = arith.constant 0 : i32
    %c0_i32_1 = arith.constant 0 : i32
    %c0_i32_2 = arith.constant 0 : i32
    return %arg0, %arg1, %c0_i32, %c0_i32_0, %c0_i32_1 : i32, i32, i32, i32, i32
  }
}

module attributes {stable_mosaic.version = 11 : i64} {
  func.func @_conv3x3_kernel(%arg0: i32, %arg1: i32, %arg2: memref<1x8x16x4xbf16, #tpu.memory_space<vmem>>, %arg3: memref<1x1x2x16x4xbf16, #tpu.memory_space<vmem>>, %arg4: memref<1x8x16x4xbf16, #tpu.memory_space<vmem>>, %arg5: memref<1x1x2x16x4xbf16, #tpu.memory_space<vmem>>, %arg6: memref<72x4xbf16, #tpu.memory_space<vmem>>, %arg7: memref<1x4xf32, #tpu.memory_space<vmem>>, %arg8: memref<1x8x16x4xf32, #tpu.memory_space<vmem>>, %arg9: memref<10x32x8xbf16, #tpu.memory_space<vmem>>) attributes {dimension_semantics = [#tpu.dimension_semantics<parallel>, #tpu.dimension_semantics<parallel>], iteration_bounds = array<i64: 2, 2>, scalar_prefetch = 0 : i64, scratch_operands = 1 : i64, tpu.core_type = #tpu.core_type<tc>, window_params = [{transform_indices = @transform_0, window_bounds = array<i64: 1, 8, 16, 4>}, {transform_indices = @transform_1, window_bounds = array<i64: 1, 1, 2, 16, 4>}, {transform_indices = @transform_2, window_bounds = array<i64: 1, 8, 16, 4>}, {transform_indices = @transform_3, window_bounds = array<i64: 1, 1, 2, 16, 4>}, {pipeline_mode = #tpu.pipeline_mode<synchronous>, transform_indices = @transform_4, window_bounds = array<i64: 72, 4>}, {pipeline_mode = #tpu.pipeline_mode<synchronous>, transform_indices = @transform_5, window_bounds = array<i64: 1, 4>}, {transform_indices = @transform_6, window_bounds = array<i64: 1, 8, 16, 4>}]} {
    %cst = arith.constant 0.000000e+00 : bf16
    %0 = vector.broadcast %cst : bf16 to vector<10x8x8xbf16>
    %c0 = arith.constant 0 : index
    %c0_0 = arith.constant 0 : index
    %c0_1 = arith.constant 0 : index
    %1 = vector.load %arg9[%c0, %c0_0, %c0_1] : memref<10x32x8xbf16, #tpu.memory_space<vmem>>, vector<10x8x8xbf16>
    tpu.vector_store %arg9[%c0, %c0_0, %c0_1], %0 {strides = array<i32>} : memref<10x32x8xbf16, #tpu.memory_space<vmem>>, vector<10x8x8xbf16>,
    %cst_2 = arith.constant 0.000000e+00 : bf16
    %2 = vector.broadcast %cst_2 : bf16 to vector<10x8x8xbf16>
    %c0_3 = arith.constant 0 : index
    %c24 = arith.constant 24 : index
    %c0_4 = arith.constant 0 : index
    %3 = vector.load %arg9[%c0_3, %c24, %c0_4] : memref<10x32x8xbf16, #tpu.memory_space<vmem>>, vector<10x8x8xbf16>
    tpu.vector_store %arg9[%c0_3, %c24, %c0_4], %2 {strides = array<i32>} : memref<10x32x8xbf16, #tpu.memory_space<vmem>>, vector<10x8x8xbf16>,
    %c0_5 = arith.constant 0 : index
    %c0_6 = arith.constant 0 : index
    %c0_7 = arith.constant 0 : index
    %c0_8 = arith.constant 0 : index
    %4 = vector.load %arg2[%c0_5, %c0_6, %c0_7, %c0_8] : memref<1x8x16x4xbf16, #tpu.memory_space<vmem>>, vector<1x8x16x4xbf16>
    %5 = vector.shape_cast %4 : vector<1x8x16x4xbf16> to vector<8x16x4xbf16>
    %c0_9 = arith.constant 0 : index
    %c0_10 = arith.constant 0 : index
    %c0_11 = arith.constant 0 : index
    %c0_12 = arith.constant 0 : index
    %6 = vector.load %arg4[%c0_9, %c0_10, %c0_11, %c0_12] : memref<1x8x16x4xbf16, #tpu.memory_space<vmem>>, vector<1x8x16x4xbf16>
    %7 = vector.shape_cast %6 : vector<1x8x16x4xbf16> to vector<8x16x4xbf16>
    %8 = tpu.concatenate %5, %7 in 2 : vector<8x16x4xbf16>, vector<8x16x4xbf16> -> vector<8x16x8xbf16>
    %c1 = arith.constant 1 : index
    %c8 = arith.constant 8 : index
    %c0_13 = arith.constant 0 : index
    %9 = vector.load %arg9[%c1, %c8, %c0_13] : memref<10x32x8xbf16, #tpu.memory_space<vmem>>, vector<8x16x8xbf16>
    tpu.vector_store %arg9[%c1, %c8, %c0_13], %8 {strides = array<i32>} : memref<10x32x8xbf16, #tpu.memory_space<vmem>>, vector<8x16x8xbf16>,
    %c0_14 = arith.constant 0 : index
    %c0_15 = arith.constant 0 : index
    %c0_16 = arith.constant 0 : index
    %c0_17 = arith.constant 0 : index
    %c0_18 = arith.constant 0 : index
    %10 = vector.load %arg3[%c0_14, %c0_15, %c0_16, %c0_17, %c0_18] : memref<1x1x2x16x4xbf16, #tpu.memory_space<vmem>>, vector<1x1x1x16x4xbf16>
    %11 = vector.shape_cast %10 : vector<1x1x1x16x4xbf16> to vector<1x16x4xbf16>
    %c0_19 = arith.constant 0 : index
    %c0_20 = arith.constant 0 : index
    %c0_21 = arith.constant 0 : index
    %c0_22 = arith.constant 0 : index
    %c0_23 = arith.constant 0 : index
    %12 = vector.load %arg5[%c0_19, %c0_20, %c0_21, %c0_22, %c0_23] : memref<1x1x2x16x4xbf16, #tpu.memory_space<vmem>>, vector<1x1x1x16x4xbf16>
    %13 = vector.shape_cast %12 : vector<1x1x1x16x4xbf16> to vector<1x16x4xbf16>
    %14 = tpu.concatenate %11, %13 in 2 : vector<1x16x4xbf16>, vector<1x16x4xbf16> -> vector<1x16x8xbf16>
    %c0_24 = arith.constant 0 : index
    %c8_25 = arith.constant 8 : index
    %c0_26 = arith.constant 0 : index
    %15 = vector.load %arg9[%c0_24, %c8_25, %c0_26] : memref<10x32x8xbf16, #tpu.memory_space<vmem>>, vector<1x16x8xbf16>
    tpu.vector_store %arg9[%c0_24, %c8_25, %c0_26], %14 {strides = array<i32>} : memref<10x32x8xbf16, #tpu.memory_space<vmem>>, vector<1x16x8xbf16>,
    %c0_27 = arith.constant 0 : index
    %c0_28 = arith.constant 0 : index
    %c1_29 = arith.constant 1 : index
    %c0_30 = arith.constant 0 : index
    %c0_31 = arith.constant 0 : index
    %16 = vector.load %arg3[%c0_27, %c0_28, %c1_29, %c0_30, %c0_31] : memref<1x1x2x16x4xbf16, #tpu.memory_space<vmem>>, vector<1x1x1x16x4xbf16>
    %17 = vector.shape_cast %16 : vector<1x1x1x16x4xbf16> to vector<1x16x4xbf16>
    %c0_32 = arith.constant 0 : index
    %c0_33 = arith.constant 0 : index
    %c1_34 = arith.constant 1 : index
    %c0_35 = arith.constant 0 : index
    %c0_36 = arith.constant 0 : index
    %18 = vector.load %arg5[%c0_32, %c0_33, %c1_34, %c0_35, %c0_36] : memref<1x1x2x16x4xbf16, #tpu.memory_space<vmem>>, vector<1x1x1x16x4xbf16>
    %19 = vector.shape_cast %18 : vector<1x1x1x16x4xbf16> to vector<1x16x4xbf16>
    %20 = tpu.concatenate %17, %19 in 2 : vector<1x16x4xbf16>, vector<1x16x4xbf16> -> vector<1x16x8xbf16>
    %c9 = arith.constant 9 : index
    %c8_37 = arith.constant 8 : index
    %c0_38 = arith.constant 0 : index
    %21 = vector.load %arg9[%c9, %c8_37, %c0_38] : memref<10x32x8xbf16, #tpu.memory_space<vmem>>, vector<1x16x8xbf16>
    tpu.vector_store %arg9[%c9, %c8_37, %c0_38], %20 {strides = array<i32>} : memref<10x32x8xbf16, #tpu.memory_space<vmem>>, vector<1x16x8xbf16>,
    %c0_39 = arith.constant 0 : index
    %c7 = arith.constant 7 : index
    %c0_40 = arith.constant 0 : index
    %22 = vector.load %arg9[%c0_39, %c7, %c0_40] : memref<10x32x8xbf16, #tpu.memory_space<vmem>>, vector<8x16x8xbf16>
    %c0_41 = arith.constant 0 : index
    %c8_42 = arith.constant 8 : index
    %c0_43 = arith.constant 0 : index
    %23 = vector.load %arg9[%c0_41, %c8_42, %c0_43] : memref<10x32x8xbf16, #tpu.memory_space<vmem>>, vector<8x16x8xbf16>
    %c0_44 = arith.constant 0 : index
    %c9_45 = arith.constant 9 : index
    %c0_46 = arith.constant 0 : index
    %24 = vector.load %arg9[%c0_44, %c9_45, %c0_46] : memref<10x32x8xbf16, #tpu.memory_space<vmem>>, vector<8x16x8xbf16>
    %c1_47 = arith.constant 1 : index
    %c7_48 = arith.constant 7 : index
    %c0_49 = arith.constant 0 : index
    %25 = vector.load %arg9[%c1_47, %c7_48, %c0_49] : memref<10x32x8xbf16, #tpu.memory_space<vmem>>, vector<8x16x8xbf16>
    %c1_50 = arith.constant 1 : index
    %c8_51 = arith.constant 8 : index
    %c0_52 = arith.constant 0 : index
    %26 = vector.load %arg9[%c1_50, %c8_51, %c0_52] : memref<10x32x8xbf16, #tpu.memory_space<vmem>>, vector<8x16x8xbf16>
    %c1_53 = arith.constant 1 : index
    %c9_54 = arith.constant 9 : index
    %c0_55 = arith.constant 0 : index
    %27 = vector.load %arg9[%c1_53, %c9_54, %c0_55] : memref<10x32x8xbf16, #tpu.memory_space<vmem>>, vector<8x16x8xbf16>
    %c2 = arith.constant 2 : index
    %c7_56 = arith.constant 7 : index
    %c0_57 = arith.constant 0 : index
    %28 = vector.load %arg9[%c2, %c7_56, %c0_57] : memref<10x32x8xbf16, #tpu.memory_space<vmem>>, vector<8x16x8xbf16>
    %c2_58 = arith.constant 2 : index
    %c8_59 = arith.constant 8 : index
    %c0_60 = arith.constant 0 : index
    %29 = vector.load %arg9[%c2_58, %c8_59, %c0_60] : memref<10x32x8xbf16, #tpu.memory_space<vmem>>, vector<8x16x8xbf16>
    %c2_61 = arith.constant 2 : index
    %c9_62 = arith.constant 9 : index
    %c0_63 = arith.constant 0 : index
    %30 = vector.load %arg9[%c2_61, %c9_62, %c0_63] : memref<10x32x8xbf16, #tpu.memory_space<vmem>>, vector<8x16x8xbf16>
    %31 = tpu.concatenate %22, %23, %24, %25, %26, %27, %28, %29, %30 in 2 : vector<8x16x8xbf16>, vector<8x16x8xbf16>, vector<8x16x8xbf16>, vector<8x16x8xbf16>, vector<8x16x8xbf16>, vector<8x16x8xbf16>, vector<8x16x8xbf16>, vector<8x16x8xbf16>, vector<8x16x8xbf16> -> vector<8x16x72xbf16>
    %32 = vector.shape_cast %31 : vector<8x16x72xbf16> to vector<128x72xbf16>
    %c0_64 = arith.constant 0 : index
    %c0_65 = arith.constant 0 : index
    %33 = vector.load %arg6[%c0_64, %c0_65] : memref<72x4xbf16, #tpu.memory_space<vmem>>, vector<72x4xbf16>
    %cst_66 = arith.constant dense<0.000000e+00> : vector<128x4xf32>
    %34 = tpu.matmul %32, %33, %cst_66 {dimension_numbers = #tpu.dot_dimension_numbers<[1], [0], [0], [1], [0, 0, 1, 1], [], []>} : vector<128x72xbf16>, vector<72x4xbf16>, vector<128x4xf32> -> vector<128x4xf32>
    %c0_67 = arith.constant 0 : index
    %c0_68 = arith.constant 0 : index
    %35 = vector.load %arg7[%c0_67, %c0_68] : memref<1x4xf32, #tpu.memory_space<vmem>>, vector<1x4xf32>
    %36 = vector.broadcast %35 : vector<1x4xf32> to vector<128x4xf32>
    %37 = arith.addf %34, %36 : vector<128x4xf32>
    %cst_69 = arith.constant 0.000000e+00 : f32
    %38 = vector.broadcast %cst_69 : f32 to vector<128x4xf32>
    %39 = arith.maximumf %37, %38 : vector<128x4xf32>
    %40 = vector.shape_cast %39 : vector<128x4xf32> to vector<8x16x4xf32>
    %c0_70 = arith.constant 0 : index
    %c0_71 = arith.constant 0 : index
    %c0_72 = arith.constant 0 : index
    %c0_73 = arith.constant 0 : index
    %41 = vector.load %arg8[%c0_70, %c0_71, %c0_72, %c0_73] : memref<1x8x16x4xf32, #tpu.memory_space<vmem>>, vector<1x8x16x4xf32>
    %42 = vector.shape_cast %41 : vector<1x8x16x4xf32> to vector<8x16x4xf32>
    %43 = vector.shape_cast %40 : vector<8x16x4xf32> to vector<1x8x16x4xf32>
    tpu.vector_store %arg8[%c0_70, %c0_71, %c0_72, %c0_73], %43 {strides = array<i32>} : memref<1x8x16x4xf32, #tpu.memory_space<vmem>>, vector<1x8x16x4xf32>,
    return
  }
  func.func @transform_0(%arg0: i32, %arg1: i32) -> (i32, i32, i32, i32) {
    %c0_i32 = arith.constant 0 : i32
    %c0_i32_0 = arith.constant 0 : i32
    %c0_i32_1 = arith.constant 0 : i32
    return %arg0, %arg1, %c0_i32, %c0_i32_0 : i32, i32, i32, i32
  }
  func.func @transform_1(%arg0: i32, %arg1: i32) -> (i32, i32, i32, i32, i32) {
    %c0_i32 = arith.constant 0 : i32
    %c0_i32_0 = arith.constant 0 : i32
    %c0_i32_1 = arith.constant 0 : i32
    %c0_i32_2 = arith.constant 0 : i32
    return %arg0, %arg1, %c0_i32, %c0_i32_0, %c0_i32_1 : i32, i32, i32, i32, i32
  }
  func.func @transform_2(%arg0: i32, %arg1: i32) -> (i32, i32, i32, i32) {
    %c0_i32 = arith.constant 0 : i32
    %c0_i32_0 = arith.constant 0 : i32
    %c0_i32_1 = arith.constant 0 : i32
    return %arg0, %arg1, %c0_i32, %c0_i32_0 : i32, i32, i32, i32
  }
  func.func @transform_3(%arg0: i32, %arg1: i32) -> (i32, i32, i32, i32, i32) {
    %c0_i32 = arith.constant 0 : i32
    %c0_i32_0 = arith.constant 0 : i32
    %c0_i32_1 = arith.constant 0 : i32
    %c0_i32_2 = arith.constant 0 : i32
    return %arg0, %arg1, %c0_i32, %c0_i32_0, %c0_i32_1 : i32, i32, i32, i32, i32
  }
  func.func @transform_4(%arg0: i32, %arg1: i32) -> (i32, i32) {
    %c0_i32 = arith.constant 0 : i32
    %c0_i32_0 = arith.constant 0 : i32
    %c0_i32_1 = arith.constant 0 : i32
    return %c0_i32, %c0_i32_0 : i32, i32
  }
  func.func @transform_5(%arg0: i32, %arg1: i32) -> (i32, i32) {
    %c0_i32 = arith.constant 0 : i32
    %c0_i32_0 = arith.constant 0 : i32
    %c0_i32_1 = arith.constant 0 : i32
    return %c0_i32, %c0_i32_0 : i32, i32
  }
  func.func @transform_6(%arg0: i32, %arg1: i32) -> (i32, i32, i32, i32) {
    %c0_i32 = arith.constant 0 : i32
    %c0_i32_0 = arith.constant 0 : i32
    %c0_i32_1 = arith.constant 0 : i32
    return %arg0, %arg1, %c0_i32, %c0_i32_0 : i32, i32, i32, i32
  }
}

</mosaic_0001>

<llo_original>
// kernel: tile.9
$region0: #{tile.9}
  %s0 = inlined_call_operand.vmem [shape: f32[4,4], index: 0, kind: input, shape index: {}]
  %s1 = inlined_call_operand.vmem [shape: f32[1,16], index: 1, kind: output, shape index: {}]
  $region1: #{tile.9} parent=0
    #allocation0 [shape = 'u8[4096]{0}', space=vmem, size = 0x1000, scoped, tag = 'scoped mem for output reshape']
    #allocation1 [shape = 'u8[4096]{0}', space=vmem, size = 0x1000, scoped, tag = 'scoped mem for input reshape']
    %s3 = sshllo.u32 0, 4
    %v4 = vld [vmem:[%s0] sm:%s3]
    %5 = vst [vmem:[#allocation1] sm:%s3] %v4
    %v6 = vld [vmem:[#allocation1] sm:$0x1]
    %vm7 = vcmask 31744
    %8 = vst.msk [vmem:[#allocation0] sm:$0x1] %vm7, %v6
    %s9 = scalar_lea.vmem [#allocation1], 3
    %v10 = vld [vmem:[%s9] sm:$0x1]
    %11 = vrot.lane.b32.xlu0 %v10, 12
    %v12 = vpop.permute.xlu0 %11
    %vm13 = vcmask 130144
    %14 = vst.msk [vmem:[#allocation0] sm:$0x1] %vm13, %v12
    %s15 = scalar_lea.vmem [#allocation1], 2
    %v16 = vld [vmem:[%s15] sm:$0x1]
    %17 = vrot.lane.b32.xlu0 %v16, 8
    %v18 = vpop.permute.xlu0 %17
    %vm19 = vcmask 97344
    %20 = vst.msk [vmem:[#allocation0] sm:$0x1] %vm19, %v18
    %s21 = scalar_lea.vmem [#allocation1], 1
    %v22 = vld [vmem:[%s21] sm:$0x1]
    %23 = vrot.lane.b32.xlu0 %v22, 4
    %v24 = vpop.permute.xlu0 %23
    %vm25 = vcmask 64544
    %26 = vst.msk [vmem:[#allocation0] sm:$0x1] %vm25, %v24
    %s28 = sshllo.u32 0, 1
    %v30 = vld [vmem:[#allocation0] sm:%s28]
    %s31 = sshllo.u32 0, 1
    %32 = vst [vmem:[%s1] sm:%s31] %v30

// kernel: tile.8
$region0: #{tile.8}
  #allocation2 [shape = 's32[1]{0}', space=sflag, size = 0x4, scoped, tag = 'scoped memory for tile.8']
  %s0 = inlined_call_operand.hbm [shape: f32[4], index: 0, kind: input, shape index: {}]
  %s1 = inlined_call_operand.vmem [shape: f32[4,4], index: 1, kind: output, shape index: {}]
  $region1: #{tile.8} parent=0
    #allocation0 [shape = 'u8[512]{0}', space=vmem, size = 0x400, scoped, tag = 'operand span for operand 0']
    #allocation1 [shape = 's32[1]{0}', space=sflag, size = 0x4, scoped, tag = 'scoped memory for tile.8']
    %2 = vsyncpa [#allocation1], 0
    // Predicated region
    $region2: #{tile.8} parent=1 // pred_check
      _
    $region3: #{tile.8} parent=1 // pred_check_branch
      %4 = sbr.rel (0) target = $region5
    $region4: #{tile.8} parent=1 // pred_region
      %s6 = ssub.s32 16, 16
      %7 = vsyncadd [#allocation1], %s6
      %s9 = sshll.u32 [#allocation0], 4
      %s10 = int_to_ptr.vmem [resolvable:$true] %s9
      %12 = dma.hbm_to_vmem [thread:$0]  %s0, 16, %s10, [#allocation1]
    $region5: #{tile.8} parent=1 // pred_fallthru
      _
    // Predicated region
    $region6: #{tile.8} parent=1 // pred_check
      _
    $region7: #{tile.8} parent=1 // pred_check_branch
      %14 = sbr.rel (0) target = $region9
    $region8: #{tile.8} parent=1 // pred_region
      %15 = dma.done [#allocation1], 16
    $region9: #{tile.8} parent=1 // pred_fallthru
      _
    %v16 = vld [vmem:[#allocation0] ss:$0 sm:$0xff]
    %17 = vst [vmem:[%s1] sm:$0xf] %v16
    %18 = vsyncpa [#allocation1], 1

// kernel: decoder_forward.2
$region0: #{decoder_forward.2}
  #allocation0 [shape = 'u32[]', space=smem, size = 0x4, offset = 0x4, fixed_abs, tag = 'smem constant byte address 0x4 - core index']
  #allocation1 [shape = 'u32[144,128]{1,0:T(1,128)}', space=vmem, size = 0x12000, scoped, tag = 'internal scratch']
  %s0 = inlined_call_operand.vmem [shape: bf16[2,64,4], index: 0, kind: input, shape index: {}]
  %s1 = inlined_call_operand.vmem [shape: bf16[4,16], index: 1, kind: input, shape index: {}]
  %s2 = inlined_call_operand.vmem [shape: f32[1,16], index: 2, kind: input, shape index: {}]
  %s3 = inlined_call_operand.vmem [shape: bf16[2,8,2,8,8], index: 3, kind: output, shape index: {}]
  %s4 = sld [smem:[#allocation0]]
  $region45: #{decoder_forward.2} parent=0
    _
  %s6 = ssub.s32 1, %s4
  %s7 = scalar_select 0, %s6, %s4
  loop: start=0, step=1, limit=6
  $region2: #{decoder_forward.2} parent=0 // loop_pre_header
    _
  $region3: #{decoder_forward.2} parent=0 // loop_header
    %s9 = sphi 0, %s13
    %p10 = scmp.ge.s32.totalorder %s9, 6
    %s16 = sphi 0, %s28
    %s17 = sphi 0, %s24
    %s18 = sphi 0, %s16
    %s19 = sphi 0, %s17
    %s20 = sphi 0, %s18
    %s21 = sphi 0, %s19
    %s33 = sphi 0, %s35
    %s36 = sphi 0, %s33
    %s37 = sphi 0, %s36
    %s53 = sphi 0, %s37
    %s57 = sphi 0, %s57
    %s59 = sphi 0, %s57
    %s60 = sphi 0, %s59
    %s74 = sphi 0, %s60
    %s78 = sphi 0, %s78
    %s80 = sphi 0, %s78
    %s81 = sphi 0, %s80
    %s95 = sphi 0, %s81
    %s103 = sphi 0, %s105
    %s106 = sphi 0, %s103
    %s107 = sphi 0, %s106
    %s123 = sphi 0, %s107
  $region4: #{decoder_forward.2} parent=0 // loop_header_branch
    %12 = sbr.rel (%p10) target = $region8
  $region5: #{decoder_forward.2} parent=0 // loop_body
    %s14 = ssub.s32 %s9, 1
    %s15 = ssub.s32 %s9, 2
    %s22 = sadd.s32 1, %s17
    %p23 = scmp.ge.s32.totalorder %s22, 2
    %s24 = scalar_select %p23, 0, %s22
    %s25 = sadd.s32 1, %s16
    %s26 = scalar_select %p23, %s25, %s16
    %p27 = scmp.ge.s32.totalorder %s26, 2
    %s28 = scalar_select %p27, 0, %s26
    %s29 = ssub.s32 %s16, %s28
    %s30 = ssub.s32 %s17, %s24
    %s31 = sor.u32 %s29, %s30
    %p32 = scmp.eq.s32.totalorder %s31, 0
    %s34 = sadd.s32 %s33, 1
    %s35 = scalar_select %p32, %s33, %s34
    %p38 = pneg %p32
    %p39 = scmp.eq.s32.totalorder %s9, 3
    %p40 = por %p38, %p39
    %p41 = scmp.ne.s32.totalorder %s33, %s36
    %p42 = scmp.eq.s32.totalorder %s9, 0
    %p43 = por %p41, %p42
    %p44 = scmp.ne.s32.totalorder %s33, %s36
    %p45 = scmp.eq.s32.totalorder %s14, 3
    %p46 = por %p44, %p45
    %p47 = scmp.ne.s32.totalorder %s36, %s37
    %p48 = scmp.eq.s32.totalorder %s14, 0
    %p49 = por %p47, %p48
    %p50 = scmp.ne.s32.totalorder %s36, %s37
    %p51 = scmp.eq.s32.totalorder %s15, 3
    %p52 = por %p50, %p51
    %p54 = scmp.ne.s32.totalorder %s37, %s53
    %p55 = scmp.eq.s32.totalorder %s15, 0
    %p56 = por %p54, %p55
    %s58 = sadd.s32 %s57, 1
    %p61 = scmp.eq.s32.totalorder %s9, 3
    %p62 = scmp.ne.s32.totalorder %s57, %s59
    %p63 = scmp.eq.s32.totalorder %s9, 0
    %p64 = por %p62, %p63
    %p65 = scmp.ne.s32.totalorder %s57, %s59
    %p66 = scmp.eq.s32.totalorder %s14, 3
    %p67 = por %p65, %p66
    %p68 = scmp.ne.s32.totalorder %s59, %s60
    %p69 = scmp.eq.s32.totalorder %s14, 0
    %p70 = por %p68, %p69
    %p71 = scmp.ne.s32.totalorder %s59, %s60
    %p72 = scmp.eq.s32.totalorder %s15, 3
    %p73 = por %p71, %p72
    %p75 = scmp.ne.s32.totalorder %s60, %s74
    %p76 = scmp.eq.s32.totalorder %s15, 0
    %p77 = por %p75, %p76
    %s79 = sadd.s32 %s78, 1
    %p82 = scmp.eq.s32.totalorder %s9, 3
    %p83 = scmp.ne.s32.totalorder %s78, %s80
    %p84 = scmp.eq.s32.totalorder %s9, 0
    %p85 = por %p83, %p84
    %p86 = scmp.ne.s32.totalorder %s78, %s80
    %p87 = scmp.eq.s32.totalorder %s14, 3
    %p88 = por %p86, %p87
    %p89 = scmp.ne.s32.totalorder %s80, %s81
    %p90 = scmp.eq.s32.totalorder %s14, 0
    %p91 = por %p89, %p90
    %p92 = scmp.ne.s32.totalorder %s80, %s81
    %p93 = scmp.eq.s32.totalorder %s15, 3
    %p94 = por %p92, %p93
    %p96 = scmp.ne.s32.totalorder %s81, %s95
    %p97 = scmp.eq.s32.totalorder %s15, 0
    %p98 = por %p96, %p97
    %s99 = ssub.s32 %s16, %s28
    %s100 = ssub.s32 %s17, %s24
    %s101 = sor.u32 %s99, %s100
    %p102 = scmp.eq.s32.totalorder %s101, 0
    %s104 = sadd.s32 %s103, 1
    %s105 = scalar_select %p102, %s103, %s104
    %p108 = pneg %p102
    %p109 = scmp.eq.s32.totalorder %s9, 3
    %p110 = por %p108, %p109
    %p111 = scmp.ne.s32.totalorder %s103, %s106
    %p112 = scmp.eq.s32.totalorder %s9, 0
    %p113 = por %p111, %p112
    %p114 = scmp.ne.s32.totalorder %s103, %s106
    %p115 = scmp.eq.s32.totalorder %s14, 3
    %p116 = por %p114, %p115
    %p117 = scmp.ne.s32.totalorder %s106, %s107
    %p118 = scmp.eq.s32.totalorder %s14, 0
    %p119 = por %p117, %p118
    %p120 = scmp.ne.s32.totalorder %s106, %s107
    %p121 = scmp.eq.s32.totalorder %s15, 3
    %p122 = por %p120, %p121
    %p124 = scmp.ne.s32.totalorder %s107, %s123
    %p125 = scmp.eq.s32.totalorder %s15, 0
    %p126 = por %p124, %p125
    %p127 = scmp.le.s32.totalorder 1, %s9
    %p128 = scmp.lt.s32.totalorder %s9, 5
    %p129 = pnand %p127, %p128
    %p130 = pneg %p129
    // Predicated region
    $region9: #{decoder_forward.2} parent=5 // pred_check
      _
    $region10: #{decoder_forward.2} parent=5 // pred_check_branch
      %132 = sbr.rel (%p129) target = $region12
    $region11: #{decoder_forward.2} parent=5 // pred_region
      %s133 = ssub.s32 %s9, 1
      // Predicated region
      $region13: #{decoder_forward.2} parent=11 // pred_check
        %p134 = pneg %p70
      $region14: #{decoder_forward.2} parent=11 // pred_check_branch
        %136 = sbr.rel (%p134) target = $region16
      $region15: #{decoder_forward.2} parent=11 // pred_region
        _
      $region16: #{decoder_forward.2} parent=11 // pred_fallthru
        _
      // Predicated region
      $region17: #{decoder_forward.2} parent=11 // pred_check
        %p137 = pneg %p91
      $region18: #{decoder_forward.2} parent=11 // pred_check_branch
        %139 = sbr.rel (%p137) target = $region20
      $region19: #{decoder_forward.2} parent=11 // pred_region
        _
      $region20: #{decoder_forward.2} parent=11 // pred_fallthru
        _
    $region12: #{decoder_forward.2} parent=5 // pred_fallthru
      _
    %p140 = scmp.lt.s32.totalorder %s9, 4
    // Predicated region
    $region21: #{decoder_forward.2} parent=5 // pred_check
      %p141 = pneg %p140
    $region22: #{decoder_forward.2} parent=5 // pred_check_branch
      %143 = sbr.rel (%p141) target = $region24
    $region23: #{decoder_forward.2} parent=5 // pred_region
      // Predicated region
      $region25: #{decoder_forward.2} parent=23 // pred_check
        %p144 = pneg %p43
      $region26: #{decoder_forward.2} parent=23 // pred_check_branch
        %146 = sbr.rel (%p144) target = $region28
      $region27: #{decoder_forward.2} parent=23 // pred_region
        %s147 = smul.u32 4, %s17
        %p148 = scmp.lt.s32.totalorder %s16, 1
        %s149 = scalar_select %p148, %s16, 1
        %p150 = scmp.lt.s32.totalorder %s147, 7
        %s151 = scalar_select %p150, %s147, 7
        %s152 = smul.addr %s149, 8
        %s153 = sadd.s32 %s151, %s152
        %s154 = smul.addr %s153, 4
        %s155 = scalar_lea.vmem %s0, %s154
        %s156 = smul.u32 4, %s17
      $region28: #{decoder_forward.2} parent=23 // pred_fallthru
        _
    $region24: #{decoder_forward.2} parent=5 // pred_fallthru
      _
    %p157 = scmp.le.s32.totalorder 1, %s9
    %p158 = scmp.lt.s32.totalorder %s9, 5
    %p159 = pnand %p157, %p158
    %p160 = pneg %p159
    // Predicated region
    $region29: #{decoder_forward.2} parent=5 // pred_check
      _
    $region30: #{decoder_forward.2} parent=5 // pred_check_branch
      %162 = sbr.rel (%p159) target = $region32
    $region31: #{decoder_forward.2} parent=5 // pred_region
      %s163 = ssub.s32 %s9, 1
      %s164 = smul.u32 4, %s19
      %p165 = scmp.lt.s32.totalorder %s18, 1
      %s166 = scalar_select %p165, %s18, 1
      %p167 = scmp.lt.s32.totalorder %s164, 7
      %s168 = scalar_select %p167, %s164, 7
      %s169 = smul.addr %s166, 8
      %s170 = sadd.s32 %s168, %s169
      %s171 = smul.addr %s170, 4
      %s172 = scalar_lea.vmem %s0, %s171
      %p173 = pneg %p49
      %p174 = pneg %p46
      %p175 = pneg %p70
      %p176 = pneg %p67
      %p177 = pneg %p91
      %p178 = pneg %p88
      %p179 = pneg %p119
      %p180 = pneg %p116
      %s181 = smul.u32 4, %s19
      %p182 = scmp.lt.s32.totalorder %s18, 1
      %s183 = scalar_select %p182, %s18, 1
      %p184 = scmp.lt.s32.totalorder %s181, 7
      %s185 = scalar_select %p184, %s181, 7
      %s186 = smul.addr %s185, 2
      %s187 = smul.addr %s183, 16
      %s188 = sadd.s32 %s186, %s187
      %s189 = smul.addr %s188, 4
      %s190 = scalar_lea.vmem %s3, %s189
      %s191 = smul.u32 4, %s19
      %p192 = scmp.lt.s32.totalorder %s18, 1
      %s193 = scalar_select %p192, %s18, 1
      %p194 = scmp.lt.s32.totalorder %s191, 7
      %s195 = scalar_select %p194, %s191, 7
      %s196 = smul.addr %s193, 8
      %s197 = sadd.s32 %s195, %s196
      %s198 = smul.addr %s197, 4
      %s199 = scalar_lea.vmem %s0, %s198
      %s200 = smul.u32 4, %s19
      %s201 = smul.u32 4, %s19
      %p202 = scmp.lt.s32.totalorder %s18, 1
      %s203 = scalar_select %p202, %s18, 1
      %p204 = scmp.lt.s32.totalorder %s201, 7
      %s205 = scalar_select %p204, %s201, 7
      %s206 = smul.addr %s205, 2
      %s207 = smul.addr %s203, 16
      %s208 = sadd.s32 %s206, %s207
      %s209 = smul.addr %s208, 4
      %s210 = scalar_lea.vmem %s3, %s209
      %s211 = smul.u32 4, %s19
      %v213 = vld [vmem:[%s199] sm:$0xf]
      %v214 = vld [vmem:[%s199 + $0x4] sm:$0xf]
      %v215 = vld [vmem:[%s199 + $0x8] sm:$0xf]
      %v216 = vld [vmem:[%s199 + $0xc] sm:$0xf]
      %v217 = vld [vmem:[%s1] sm:$0x3]
      %v218 = vld [vmem:[%s2] sm:$0x1]
      %v220 = vlaneseq
      %v221 = vshrl.u32 %v220, 7
      %v222 = vsub.s32 0, %v221
      %v223 = vrot.slane %v218, %v222
      %v229 = vunpack.c.l.b16 %v213
      %v230 = vunpack.c.l.b16 %v214
      %v231 = vunpack.c.l.b16 %v215
      %v232 = vunpack.c.l.b16 %v216
      %v233 = vpack.c.b16 %v230, %v229
      %v234 = vpack.c.b16 %v232, %v231
      %vm235 = vcmask 31744
      %v237 = vsel %vm235, %v233, 0
      %v240 = vsel %vm235, %v234, 0
      %vm242 = vcmask 1041408
      %v244 = vsel %vm242, %v217, 0
      %246 = vmatprep.subr.bf16.mxu0 0
      %247 = vmatpush1.bf16.msra.mxu0 %v244
      %248 = vmatprep.subr.bf16.mxu0 0
      %249 = vmatpush1.bf16.msra.mxu0 0
      %250 = vmatprep.subr.bf16.mxu0 0
      %251 = vmatpush1.bf16.msra.mxu0 0
      %252 = vmatprep.subr.bf16.mxu0 0
      %253 = vmatpush1.bf16.msra.mxu0 0
      %254 = vmatprep.subr.bf16.mxu0 0
      %255 = vmatpush1.bf16.msra.mxu0 0
      %256 = vmatprep.subr.bf16.mxu0 0
      %257 = vmatpush1.bf16.msra.mxu0 0
      %258 = vmatprep.subr.bf16.mxu0 0
      %259 = vmatpush1.bf16.msra.mxu0 0
      %260 = vmatprep.subr.bf16.mxu0 0
      %261 = vmatpush1.bf16.msra.mxu0 0
      %262 = vmatprep.subr.bf16.mxu0 0
      %263 = vmatpush1.bf16.msra.mxu0 0
      %264 = vmatprep.subr.bf16.mxu0 0
      %265 = vmatpush1.bf16.msra.mxu0 0
      %266 = vmatprep.subr.bf16.mxu0 0
      %267 = vmatpush1.bf16.msra.mxu0 0
      %268 = vmatprep.subr.bf16.mxu0 0
      %269 = vmatpush1.bf16.msra.mxu0 0
      %270 = vmatprep.subr.bf16.mxu0 0
      %271 = vmatpush1.bf16.msra.mxu0 0
      %272 = vmatprep.subr.bf16.mxu0 0
      %273 = vmatpush1.bf16.msra.mxu0 0
      %274 = vmatprep.subr.bf16.mxu0 0
      %275 = vmatpush1.bf16.msra.mxu0 0
      %276 = vmatprep.subr.bf16.mxu0 0
      %277 = vmatpush1.bf16.msra.mxu0 0
      %278 = vmatprep.mubr.bf16.mxu0 0
      %279 = vmatmul.mubr.bf16.gmra.mrb[0].mxu0 %v237
      %v280 = vpop.f32.mrb[0].mxu0
      %v281 = vadd.f32 %v223, %v280
      %v282 = vpop.f32.mrb[0].mxu0
      %v283 = vpop.f32.mrb[0].mxu0
      %v284 = vadd.f32 %v223, %v283
      %v285 = vpop.f32.mrb[0].mxu0
      %286 = vmatprep.mubr.bf16.mxu0 0
      %287 = vmatmul.mubr.bf16.gmra.mrb[0].mxu0 %v240
      %v288 = vpop.f32.mrb[0].mxu0
      %v289 = vadd.f32 %v223, %v288
      %v290 = vpop.f32.mrb[0].mxu0
      %v291 = vpop.f32.mrb[0].mxu0
      %v292 = vadd.f32 %v223, %v291
      %v293 = vpop.f32.mrb[0].mxu0
      %294 = vdwg.mxu0
      %v295 = vpack.c.bf16 %v281, %v281
      %v296 = vpack.c.bf16 %v284, %v284
      %v297 = vpack.c.bf16 %v289, %v289
      %v298 = vpack.c.bf16 %v292, %v292
      %vm299 = vcmask 60416
      %300 = vst.msk [vmem:[%s210] sm:$0xf] %vm299, %v295
      %301 = vst.msk [vmem:[%s210 + $0x8] sm:$0xf] %vm299, %v296
      %302 = vst.msk [vmem:[%s210 + $0x10] sm:$0xf] %vm299, %v297
      %303 = vst.msk [vmem:[%s210 + $0x18] sm:$0xf] %vm299, %v298
      %v308 = vunpack.c.l.b16 %v295
      %v309 = vunpack.c.l.b16 %v296
      %v310 = vunpack.c.l.b16 %v297
      %v311 = vunpack.c.l.b16 %v298
      %v312 = vpack.c.b16 %v308, %v308
      %v313 = vpack.c.b16 %v309, %v309
      %v314 = vpack.c.b16 %v310, %v310
      %v315 = vpack.c.b16 %v311, %v311
      %316 = vrot.lane.b32.xlu0 %v312, 120
      %v317 = vpop.permute.xlu0 %316
      %318 = vrot.lane.b32.xlu0 %v313, 120
      %v319 = vpop.permute.xlu0 %318
      %320 = vrot.lane.b32.xlu0 %v314, 120
      %v321 = vpop.permute.xlu0 %320
      %322 = vrot.lane.b32.xlu0 %v315, 120
      %v323 = vpop.permute.xlu0 %322
      %s328 = scalar_lea.vmem %s210, 4
      %329 = vst.msk [vmem:[%s328] sm:$0xf] %vm299, %v317
      %330 = vst.msk [vmem:[%s328 + $0x8] sm:$0xf] %vm299, %v319
      %331 = vst.msk [vmem:[%s328 + $0x10] sm:$0xf] %vm299, %v321
      %332 = vst.msk [vmem:[%s328 + $0x18] sm:$0xf] %vm299, %v323
      %s333 = smul.u32 4, %s19
      %p334 = scmp.lt.s32.totalorder %s18, 1
      %s335 = scalar_select %p334, %s18, 1
      %p336 = scmp.lt.s32.totalorder %s333, 7
      %s337 = scalar_select %p336, %s333, 7
      %s338 = smul.addr %s337, 2
      %s339 = smul.addr %s335, 16
      %s340 = sadd.s32 %s338, %s339
      %s341 = smul.addr %s340, 4
      %s342 = scalar_lea.vmem %s3, %s341
      // Predicated region
      $region33: #{decoder_forward.2} parent=31 // pred_check
        %p343 = pneg %p116
      $region34: #{decoder_forward.2} parent=31 // pred_check_branch
        %345 = sbr.rel (%p343) target = $region36
      $region35: #{decoder_forward.2} parent=31 // pred_region
        %s346 = smul.u32 4, %s19
      $region36: #{decoder_forward.2} parent=31 // pred_fallthru
        _
    $region32: #{decoder_forward.2} parent=5 // pred_fallthru
      _
    %p347 = scmp.le.s32.totalorder 2, %s9
    // Predicated region
    $region37: #{decoder_forward.2} parent=5 // pred_check
      %p348 = pneg %p347
    $region38: #{decoder_forward.2} parent=5 // pred_check_branch
      %350 = sbr.rel (%p348) target = $region40
    $region39: #{decoder_forward.2} parent=5 // pred_region
      %s351 = ssub.s32 %s9, 2
      // Predicated region
      $region41: #{decoder_forward.2} parent=39 // pred_check
        %p352 = pneg %p122
      $region42: #{decoder_forward.2} parent=39 // pred_check_branch
        %354 = sbr.rel (%p352) target = $region44
      $region43: #{decoder_forward.2} parent=39 // pred_region
        %s355 = smul.u32 4, %s21
        %p356 = scmp.lt.s32.totalorder %s20, 1
        %s357 = scalar_select %p356, %s20, 1
        %p358 = scmp.lt.s32.totalorder %s355, 7
        %s359 = scalar_select %p358, %s355, 7
        %s360 = smul.addr %s359, 2
        %s361 = smul.addr %s357, 16
        %s362 = sadd.s32 %s360, %s361
        %s363 = smul.addr %s362, 4
        %s364 = scalar_lea.vmem %s3, %s363
      $region44: #{decoder_forward.2} parent=39 // pred_fallthru
        _
    $region40: #{decoder_forward.2} parent=5 // pred_fallthru
      _
  $region6: #{decoder_forward.2} parent=0 // loop_footer
    %s13 = sadd.s32 1, %s9
  $region7: #{decoder_forward.2} parent=0 // loop_footer_branch
    %8 = sbr.rel target = $region3
  $region8: #{decoder_forward.2} parent=0 // loop_exit
    _

// kernel: decoder_forward.3
$region0: #{decoder_forward.3}
  #allocation0 [shape = 'u32[]', space=smem, size = 0x4, offset = 0x4, fixed_abs, tag = 'smem constant byte address 0x4 - core index']
  #allocation1 [shape = 'u32[144,128]{1,0:T(1,128)}', space=vmem, size = 0x12000, scoped, tag = 'internal scratch']
  #allocation2 [shape = 'bf16[10,32,8]{2,1,0:T(16,128)(2,1)}', space=vmem, size = 0x14000, scoped, tag = 'scratch operand']
  %s0 = inlined_call_operand.vmem [shape: bf16[2,16,16,4], index: 0, kind: input, shape index: {}]
  %s1 = inlined_call_operand.vmem [shape: bf16[2,2,2,16,4], index: 1, kind: input, shape index: {}]
  %s2 = inlined_call_operand.vmem [shape: bf16[2,16,16,4], index: 2, kind: input, shape index: {}]
  %s3 = inlined_call_operand.vmem [shape: bf16[2,2,2,16,4], index: 3, kind: input, shape index: {}]
  %s4 = inlined_call_operand.vmem [shape: bf16[72,4], index: 4, kind: input, shape index: {}]
  %s5 = inlined_call_operand.vmem [shape: f32[1,4], index: 5, kind: input, shape index: {}]
  %s6 = inlined_call_operand.vmem [shape: f32[2,16,16,4], index: 6, kind: output, shape index: {}]
  %s7 = sld [smem:[#allocation0]]
  $region57: #{decoder_forward.3} parent=0
    _
  %s9 = ssub.s32 1, %s7
  %s10 = scalar_select 0, %s9, %s7
  loop: start=0, step=1, limit=6
  $region2: #{decoder_forward.3} parent=0 // loop_pre_header
    _
  $region3: #{decoder_forward.3} parent=0 // loop_header
    %s12 = sphi 0, %s16
    %p13 = scmp.ge.s32.totalorder %s12, 6
    %s19 = sphi 0, %s31
    %s20 = sphi 0, %s27
    %s21 = sphi 0, %s19
    %s22 = sphi 0, %s20
    %s23 = sphi 0, %s21
    %s24 = sphi 0, %s22
    %s36 = sphi 0, %s38
    %s39 = sphi 0, %s36
    %s40 = sphi 0, %s39
    %s56 = sphi 0, %s40
    %s64 = sphi 0, %s66
    %s67 = sphi 0, %s64
    %s68 = sphi 0, %s67
    %s84 = sphi 0, %s68
    %s92 = sphi 0, %s94
    %s95 = sphi 0, %s92
    %s96 = sphi 0, %s95
    %s112 = sphi 0, %s96
    %s120 = sphi 0, %s122
    %s123 = sphi 0, %s120
    %s124 = sphi 0, %s123
    %s140 = sphi 0, %s124
    %s144 = sphi 0, %s144
    %s146 = sphi 0, %s144
    %s147 = sphi 0, %s146
    %s161 = sphi 0, %s147
    %s165 = sphi 0, %s165
    %s167 = sphi 0, %s165
    %s168 = sphi 0, %s167
    %s182 = sphi 0, %s168
    %s190 = sphi 0, %s192
    %s193 = sphi 0, %s190
    %s194 = sphi 0, %s193
    %s210 = sphi 0, %s194
  $region4: #{decoder_forward.3} parent=0 // loop_header_branch
    %15 = sbr.rel (%p13) target = $region8
  $region5: #{decoder_forward.3} parent=0 // loop_body
    %s17 = ssub.s32 %s12, 1
    %s18 = ssub.s32 %s12, 2
    %s25 = sadd.s32 1, %s20
    %p26 = scmp.ge.s32.totalorder %s25, 2
    %s27 = scalar_select %p26, 0, %s25
    %s28 = sadd.s32 1, %s19
    %s29 = scalar_select %p26, %s28, %s19
    %p30 = scmp.ge.s32.totalorder %s29, 2
    %s31 = scalar_select %p30, 0, %s29
    %s32 = ssub.s32 %s19, %s31
    %s33 = ssub.s32 %s20, %s27
    %s34 = sor.u32 %s32, %s33
    %p35 = scmp.eq.s32.totalorder %s34, 0
    %s37 = sadd.s32 %s36, 1
    %s38 = scalar_select %p35, %s36, %s37
    %p41 = pneg %p35
    %p42 = scmp.eq.s32.totalorder %s12, 3
    %p43 = por %p41, %p42
    %p44 = scmp.ne.s32.totalorder %s36, %s39
    %p45 = scmp.eq.s32.totalorder %s12, 0
    %p46 = por %p44, %p45
    %p47 = scmp.ne.s32.totalorder %s36, %s39
    %p48 = scmp.eq.s32.totalorder %s17, 3
    %p49 = por %p47, %p48
    %p50 = scmp.ne.s32.totalorder %s39, %s40
    %p51 = scmp.eq.s32.totalorder %s17, 0
    %p52 = por %p50, %p51
    %p53 = scmp.ne.s32.totalorder %s39, %s40
    %p54 = scmp.eq.s32.totalorder %s18, 3
    %p55 = por %p53, %p54
    %p57 = scmp.ne.s32.totalorder %s40, %s56
    %p58 = scmp.eq.s32.totalorder %s18, 0
    %p59 = por %p57, %p58
    %s60 = ssub.s32 %s19, %s31
    %s61 = ssub.s32 %s20, %s27
    %s62 = sor.u32 %s60, %s61
    %p63 = scmp.eq.s32.totalorder %s62, 0
    %s65 = sadd.s32 %s64, 1
    %s66 = scalar_select %p63, %s64, %s65
    %p69 = pneg %p63
    %p70 = scmp.eq.s32.totalorder %s12, 3
    %p71 = por %p69, %p70
    %p72 = scmp.ne.s32.totalorder %s64, %s67
    %p73 = scmp.eq.s32.totalorder %s12, 0
    %p74 = por %p72, %p73
    %p75 = scmp.ne.s32.totalorder %s64, %s67
    %p76 = scmp.eq.s32.totalorder %s17, 3
    %p77 = por %p75, %p76
    %p78 = scmp.ne.s32.totalorder %s67, %s68
    %p79 = scmp.eq.s32.totalorder %s17, 0
    %p80 = por %p78, %p79
    %p81 = scmp.ne.s32.totalorder %s67, %s68
    %p82 = scmp.eq.s32.totalorder %s18, 3
    %p83 = por %p81, %p82
    %p85 = scmp.ne.s32.totalorder %s68, %s84
    %p86 = scmp.eq.s32.totalorder %s18, 0
    %p87 = por %p85, %p86
    %s88 = ssub.s32 %s19, %s31
    %s89 = ssub.s32 %s20, %s27
    %s90 = sor.u32 %s88, %s89
    %p91 = scmp.eq.s32.totalorder %s90, 0
    %s93 = sadd.s32 %s92, 1
    %s94 = scalar_select %p91, %s92, %s93
    %p97 = pneg %p91
    %p98 = scmp.eq.s32.totalorder %s12, 3
    %p99 = por %p97, %p98
    %p100 = scmp.ne.s32.totalorder %s92, %s95
    %p101 = scmp.eq.s32.totalorder %s12, 0
    %p102 = por %p100, %p101
    %p103 = scmp.ne.s32.totalorder %s92, %s95
    %p104 = scmp.eq.s32.totalorder %s17, 3
    %p105 = por %p103, %p104
    %p106 = scmp.ne.s32.totalorder %s95, %s96
    %p107 = scmp.eq.s32.totalorder %s17, 0
    %p108 = por %p106, %p107
    %p109 = scmp.ne.s32.totalorder %s95, %s96
    %p110 = scmp.eq.s32.totalorder %s18, 3
    %p111 = por %p109, %p110
    %p113 = scmp.ne.s32.totalorder %s96, %s112
    %p114 = scmp.eq.s32.totalorder %s18, 0
    %p115 = por %p113, %p114
    %s116 = ssub.s32 %s19, %s31
    %s117 = ssub.s32 %s20, %s27
    %s118 = sor.u32 %s116, %s117
    %p119 = scmp.eq.s32.totalorder %s118, 0
    %s121 = sadd.s32 %s120, 1
    %s122 = scalar_select %p119, %s120, %s121
    %p125 = pneg %p119
    %p126 = scmp.eq.s32.totalorder %s12, 3
    %p127 = por %p125, %p126
    %p128 = scmp.ne.s32.totalorder %s120, %s123
    %p129 = scmp.eq.s32.totalorder %s12, 0
    %p130 = por %p128, %p129
    %p131 = scmp.ne.s32.totalorder %s120, %s123
    %p132 = scmp.eq.s32.totalorder %s17, 3
    %p133 = por %p131, %p132
    %p134 = scmp.ne.s32.totalorder %s123, %s124
    %p135 = scmp.eq.s32.totalorder %s17, 0
    %p136 = por %p134, %p135
    %p137 = scmp.ne.s32.totalorder %s123, %s124
    %p138 = scmp.eq.s32.totalorder %s18, 3
    %p139 = por %p137, %p138
    %p141 = scmp.ne.s32.totalorder %s124, %s140
    %p142 = scmp.eq.s32.totalorder %s18, 0
    %p143 = por %p141, %p142
    %s145 = sadd.s32 %s144, 1
    %p148 = scmp.eq.s32.totalorder %s12, 3
    %p149 = scmp.ne.s32.totalorder %s144, %s146
    %p150 = scmp.eq.s32.totalorder %s12, 0
    %p151 = por %p149, %p150
    %p152 = scmp.ne.s32.totalorder %s144, %s146
    %p153 = scmp.eq.s32.totalorder %s17, 3
    %p154 = por %p152, %p153
    %p155 = scmp.ne.s32.totalorder %s146, %s147
    %p156 = scmp.eq.s32.totalorder %s17, 0
    %p157 = por %p155, %p156
    %p158 = scmp.ne.s32.totalorder %s146, %s147
    %p159 = scmp.eq.s32.totalorder %s18, 3
    %p160 = por %p158, %p159
    %p162 = scmp.ne.s32.totalorder %s147, %s161
    %p163 = scmp.eq.s32.totalorder %s18, 0
    %p164 = por %p162, %p163
    %s166 = sadd.s32 %s165, 1
    %p169 = scmp.eq.s32.totalorder %s12, 3
    %p170 = scmp.ne.s32.totalorder %s165, %s167
    %p171 = scmp.eq.s32.totalorder %s12, 0
    %p172 = por %p170, %p171
    %p173 = scmp.ne.s32.totalorder %s165, %s167
    %p174 = scmp.eq.s32.totalorder %s17, 3
    %p175 = por %p173, %p174
    %p176 = scmp.ne.s32.totalorder %s167, %s168
    %p177 = scmp.eq.s32.totalorder %s17, 0
    %p178 = por %p176, %p177
    %p179 = scmp.ne.s32.totalorder %s167, %s168
    %p180 = scmp.eq.s32.totalorder %s18, 3
    %p181 = por %p179, %p180
    %p183 = scmp.ne.s32.totalorder %s168, %s182
    %p184 = scmp.eq.s32.totalorder %s18, 0
    %p185 = por %p183, %p184
    %s186 = ssub.s32 %s19, %s31
    %s187 = ssub.s32 %s20, %s27
    %s188 = sor.u32 %s186, %s187
    %p189 = scmp.eq.s32.totalorder %s188, 0
    %s191 = sadd.s32 %s190, 1
    %s192 = scalar_select %p189, %s190, %s191
    %p195 = pneg %p189
    %p196 = scmp.eq.s32.totalorder %s12, 3
    %p197 = por %p195, %p196
    %p198 = scmp.ne.s32.totalorder %s190, %s193
    %p199 = scmp.eq.s32.totalorder %s12, 0
    %p200 = por %p198, %p199
    %p201 = scmp.ne.s32.totalorder %s190, %s193
    %p202 = scmp.eq.s32.totalorder %s17, 3
    %p203 = por %p201, %p202
    %p204 = scmp.ne.s32.totalorder %s193, %s194
    %p205 = scmp.eq.s32.totalorder %s17, 0
    %p206 = por %p204, %p205
    %p207 = scmp.ne.s32.totalorder %s193, %s194
    %p208 = scmp.eq.s32.totalorder %s18, 3
    %p209 = por %p207, %p208
    %p211 = scmp.ne.s32.totalorder %s194, %s210
    %p212 = scmp.eq.s32.totalorder %s18, 0
    %p213 = por %p211, %p212
    %p214 = scmp.le.s32.totalorder 1, %s12
    %p215 = scmp.lt.s32.totalorder %s12, 5
    %p216 = pnand %p214, %p215
    %p217 = pneg %p216
    // Predicated region
    $region9: #{decoder_forward.3} parent=5 // pred_check
      _
    $region10: #{decoder_forward.3} parent=5 // pred_check_branch
      %219 = sbr.rel (%p216) target = $region12
    $region11: #{decoder_forward.3} parent=5 // pred_region
      %s220 = ssub.s32 %s12, 1
      // Predicated region
      $region13: #{decoder_forward.3} parent=11 // pred_check
        %p221 = pneg %p157
      $region14: #{decoder_forward.3} parent=11 // pred_check_branch
        %223 = sbr.rel (%p221) target = $region16
      $region15: #{decoder_forward.3} parent=11 // pred_region
        _
      $region16: #{decoder_forward.3} parent=11 // pred_fallthru
        _
      // Predicated region
      $region17: #{decoder_forward.3} parent=11 // pred_check
        %p224 = pneg %p178
      $region18: #{decoder_forward.3} parent=11 // pred_check_branch
        %226 = sbr.rel (%p224) target = $region20
      $region19: #{decoder_forward.3} parent=11 // pred_region
        _
      $region20: #{decoder_forward.3} parent=11 // pred_fallthru
        _
    $region12: #{decoder_forward.3} parent=5 // pred_fallthru
      _
    %p227 = scmp.lt.s32.totalorder %s12, 4
    // Predicated region
    $region21: #{decoder_forward.3} parent=5 // pred_check
      %p228 = pneg %p227
    $region22: #{decoder_forward.3} parent=5 // pred_check_branch
      %230 = sbr.rel (%p228) target = $region24
    $region23: #{decoder_forward.3} parent=5 // pred_region
      // Predicated region
      $region25: #{decoder_forward.3} parent=23 // pred_check
        %p231 = pneg %p46
      $region26: #{decoder_forward.3} parent=23 // pred_check_branch
        %233 = sbr.rel (%p231) target = $region28
      $region27: #{decoder_forward.3} parent=23 // pred_region
        %s234 = smul.u32 8, %s20
        %p235 = scmp.lt.s32.totalorder %s19, 1
        %s236 = scalar_select %p235, %s19, 1
        %p237 = scmp.lt.s32.totalorder %s234, 15
        %s238 = scalar_select %p237, %s234, 15
        %s239 = smul.addr %s238, 2
        %s240 = smul.addr %s236, 32
        %s241 = sadd.s32 %s239, %s240
        %s242 = smul.addr %s241, 4
        %s243 = scalar_lea.vmem %s0, %s242
        %s244 = smul.u32 8, %s20
      $region28: #{decoder_forward.3} parent=23 // pred_fallthru
        _
      // Predicated region
      $region29: #{decoder_forward.3} parent=23 // pred_check
        %p245 = pneg %p74
      $region30: #{decoder_forward.3} parent=23 // pred_check_branch
        %247 = sbr.rel (%p245) target = $region32
      $region31: #{decoder_forward.3} parent=23 // pred_region
        %p248 = scmp.lt.s32.totalorder %s19, 1
        %s249 = scalar_select %p248, %s19, 1
        %p250 = scmp.lt.s32.totalorder %s20, 1
        %s251 = scalar_select %p250, %s20, 1
        %s252 = smul.addr %s251, 4
        %s253 = smul.addr %s249, 8
        %s254 = sadd.s32 %s252, %s253
        %s255 = smul.addr %s254, 4
        %s256 = scalar_lea.vmem %s1, %s255
      $region32: #{decoder_forward.3} parent=23 // pred_fallthru
        _
      // Predicated region
      $region33: #{decoder_forward.3} parent=23 // pred_check
        %p257 = pneg %p102
      $region34: #{decoder_forward.3} parent=23 // pred_check_branch
        %259 = sbr.rel (%p257) target = $region36
      $region35: #{decoder_forward.3} parent=23 // pred_region
        %s260 = smul.u32 8, %s20
        %p261 = scmp.lt.s32.totalorder %s19, 1
        %s262 = scalar_select %p261, %s19, 1
        %p263 = scmp.lt.s32.totalorder %s260, 15
        %s264 = scalar_select %p263, %s260, 15
        %s265 = smul.addr %s264, 2
        %s266 = smul.addr %s262, 32
        %s267 = sadd.s32 %s265, %s266
        %s268 = smul.addr %s267, 4
        %s269 = scalar_lea.vmem %s2, %s268
        %s270 = smul.u32 8, %s20
      $region36: #{decoder_forward.3} parent=23 // pred_fallthru
        _
      // Predicated region
      $region37: #{decoder_forward.3} parent=23 // pred_check
        %p271 = pneg %p130
      $region38: #{decoder_forward.3} parent=23 // pred_check_branch
        %273 = sbr.rel (%p271) target = $region40
      $region39: #{decoder_forward.3} parent=23 // pred_region
        %p274 = scmp.lt.s32.totalorder %s19, 1
        %s275 = scalar_select %p274, %s19, 1
        %p276 = scmp.lt.s32.totalorder %s20, 1
        %s277 = scalar_select %p276, %s20, 1
        %s278 = smul.addr %s277, 4
        %s279 = smul.addr %s275, 8
        %s280 = sadd.s32 %s278, %s279
        %s281 = smul.addr %s280, 4
        %s282 = scalar_lea.vmem %s3, %s281
      $region40: #{decoder_forward.3} parent=23 // pred_fallthru
        _
    $region24: #{decoder_forward.3} parent=5 // pred_fallthru
      _
    %p283 = scmp.le.s32.totalorder 1, %s12
    %p284 = scmp.lt.s32.totalorder %s12, 5
    %p285 = pnand %p283, %p284
    %p286 = pneg %p285
    // Predicated region
    $region41: #{decoder_forward.3} parent=5 // pred_check
      _
    $region42: #{decoder_forward.3} parent=5 // pred_check_branch
      %288 = sbr.rel (%p285) target = $region44
    $region43: #{decoder_forward.3} parent=5 // pred_region
      %s289 = ssub.s32 %s12, 1
      %s290 = smul.u32 8, %s22
      %p291 = scmp.lt.s32.totalorder %s21, 1
      %s292 = scalar_select %p291, %s21, 1
      %p293 = scmp.lt.s32.totalorder %s290, 15
      %s294 = scalar_select %p293, %s290, 15
      %s295 = smul.addr %s294, 2
      %s296 = smul.addr %s292, 32
      %s297 = sadd.s32 %s295, %s296
      %s298 = smul.addr %s297, 4
      %s299 = scalar_lea.vmem %s0, %s298
      %p300 = pneg %p52
      %p301 = pneg %p49
      %p302 = scmp.lt.s32.totalorder %s21, 1
      %s303 = scalar_select %p302, %s21, 1
      %p304 = scmp.lt.s32.totalorder %s22, 1
      %s305 = scalar_select %p304, %s22, 1
      %s306 = smul.addr %s305, 4
      %s307 = smul.addr %s303, 8
      %s308 = sadd.s32 %s306, %s307
      %s309 = smul.addr %s308, 4
      %s310 = scalar_lea.vmem %s1, %s309
      %p311 = pneg %p80
      %p312 = pneg %p77
      %s313 = smul.u32 8, %s22
      %p314 = scmp.lt.s32.totalorder %s21, 1
      %s315 = scalar_select %p314, %s21, 1
      %p316 = scmp.lt.s32.totalorder %s313, 15
      %s317 = scalar_select %p316, %s313, 15
      %s318 = smul.addr %s317, 2
      %s319 = smul.addr %s315, 32
      %s320 = sadd.s32 %s318, %s319
      %s321 = smul.addr %s320, 4
      %s322 = scalar_lea.vmem %s2, %s321
      %p323 = pneg %p108
      %p324 = pneg %p105
      %p325 = scmp.lt.s32.totalorder %s21, 1
      %s326 = scalar_select %p325, %s21, 1
      %p327 = scmp.lt.s32.totalorder %s22, 1
      %s328 = scalar_select %p327, %s22, 1
      %s329 = smul.addr %s328, 4
      %s330 = smul.addr %s326, 8
      %s331 = sadd.s32 %s329, %s330
      %s332 = smul.addr %s331, 4
      %s333 = scalar_lea.vmem %s3, %s332
      %p334 = pneg %p136
      %p335 = pneg %p133
      %p336 = pneg %p157
      %p337 = pneg %p154
      %p338 = pneg %p178
      %p339 = pneg %p175
      %p340 = pneg %p206
      %p341 = pneg %p203
      %s342 = smul.u32 8, %s22
      %p343 = scmp.lt.s32.totalorder %s21, 1
      %s344 = scalar_select %p343, %s21, 1
      %p345 = scmp.lt.s32.totalorder %s342, 15
      %s346 = scalar_select %p345, %s342, 15
      %s347 = smul.addr %s346, 2
      %s348 = smul.addr %s344, 32
      %s349 = sadd.s32 %s347, %s348
      %s350 = smul.addr %s349, 8
      %s351 = scalar_lea.vmem %s6, %s350
      %s352 = smul.u32 8, %s22
      %p353 = scmp.lt.s32.totalorder %s21, 1
      %s354 = scalar_select %p353, %s21, 1
      %p355 = scmp.lt.s32.totalorder %s352, 15
      %s356 = scalar_select %p355, %s352, 15
      %s357 = smul.addr %s356, 2
      %s358 = smul.addr %s354, 32
      %s359 = sadd.s32 %s357, %s358
      %s360 = smul.addr %s359, 4
      %s361 = scalar_lea.vmem %s0, %s360
      %s362 = smul.u32 8, %s22
      %p363 = scmp.lt.s32.totalorder %s21, 1
      %s364 = scalar_select %p363, %s21, 1
      %p365 = scmp.lt.s32.totalorder %s22, 1
      %s366 = scalar_select %p365, %s22, 1
      %s367 = smul.addr %s366, 4
      %s368 = smul.addr %s364, 8
      %s369 = sadd.s32 %s367, %s368
      %s370 = smul.addr %s369, 4
      %s371 = scalar_lea.vmem %s1, %s370
      %s372 = smul.u32 8, %s22
      %p373 = scmp.lt.s32.totalorder %s21, 1
      %s374 = scalar_select %p373, %s21, 1
      %p375 = scmp.lt.s32.totalorder %s372, 15
      %s376 = scalar_select %p375, %s372, 15
      %s377 = smul.addr %s376, 2
      %s378 = smul.addr %s374, 32
      %s379 = sadd.s32 %s377, %s378
      %s380 = smul.addr %s379, 4
      %s381 = scalar_lea.vmem %s2, %s380
      %s382 = smul.u32 8, %s22
      %p383 = scmp.lt.s32.totalorder %s21, 1
      %s384 = scalar_select %p383, %s21, 1
      %p385 = scmp.lt.s32.totalorder %s22, 1
      %s386 = scalar_select %p385, %s22, 1
      %s387 = smul.addr %s386, 4
      %s388 = smul.addr %s384, 8
      %s389 = sadd.s32 %s387, %s388
      %s390 = smul.addr %s389, 4
      %s391 = scalar_lea.vmem %s3, %s390
      %s392 = smul.u32 8, %s22
      %p393 = scmp.lt.s32.totalorder %s21, 1
      %s394 = scalar_select %p393, %s21, 1
      %p395 = scmp.lt.s32.totalorder %s392, 15
      %s396 = scalar_select %p395, %s392, 15
      %s397 = smul.addr %s396, 2
      %s398 = smul.addr %s394, 32
      %s399 = sadd.s32 %s397, %s398
      %s400 = smul.addr %s399, 8
      %s401 = scalar_lea.vmem %s6, %s400
      %s402 = smul.u32 8, %s22
      %vm404 = vcmask 60416
      %405 = vst.msk [vmem:[#allocation2] sm:$0xf] %vm404, 0
      %406 = vst.msk [vmem:[#allocation2 + $0x10] sm:$0xf] %vm404, 0
      %407 = vst.msk [vmem:[#allocation2 + $0x20] sm:$0xf] %vm404, 0
      %408 = vst.msk [vmem:[#allocation2 + $0x30] sm:$0xf] %vm404, 0
      %409 = vst.msk [vmem:[#allocation2 + $0x40] sm:$0xf] %vm404, 0
      %410 = vst.msk [vmem:[#allocation2 + $0x50] sm:$0xf] %vm404, 0
      %411 = vst.msk [vmem:[#allocation2 + $0x60] sm:$0xf] %vm404, 0
      %412 = vst.msk [vmem:[#allocation2 + $0x70] sm:$0xf] %vm404, 0
      %413 = vst.msk [vmem:[#allocation2 + $0x80] sm:$0xf] %vm404, 0
      %414 = vst.msk [vmem:[#allocation2 + $0x90] sm:$0xf] %vm404, 0
      %vm415 = vcmask 64516
      %416 = vst.msk [vmem:[#allocation2 + $0x8] sm:$0xf0] %vm415, 0
      %417 = vst.msk [vmem:[#allocation2 + $0x18] sm:$0xf0] %vm415, 0
      %418 = vst.msk [vmem:[#allocation2 + $0x28] sm:$0xf0] %vm415, 0
      %419 = vst.msk [vmem:[#allocation2 + $0x38] sm:$0xf0] %vm415, 0
      %420 = vst.msk [vmem:[#allocation2 + $0x48] sm:$0xf0] %vm415, 0
      %421 = vst.msk [vmem:[#allocation2 + $0x58] sm:$0xf0] %vm415, 0
      %422 = vst.msk [vmem:[#allocation2 + $0x68] sm:$0xf0] %vm415, 0
      %423 = vst.msk [vmem:[#allocation2 + $0x78] sm:$0xf0] %vm415, 0
      %424 = vst.msk [vmem:[#allocation2 + $0x88] sm:$0xf0] %vm415, 0
      %425 = vst.msk [vmem:[#allocation2 + $0x98] sm:$0xf0] %vm415, 0
      %v426 = vld [vmem:[%s361] sm:$0xf]
      %v427 = vld [vmem:[%s361 + $0x4] sm:$0xf]
      %v428 = vld [vmem:[%s361 + $0x8] sm:$0xf]
      %v429 = vld [vmem:[%s361 + $0xc] sm:$0xf]
      %v430 = vld [vmem:[%s361 + $0x10] sm:$0xf]
      %v431 = vld [vmem:[%s361 + $0x14] sm:$0xf]
      %v432 = vld [vmem:[%s361 + $0x18] sm:$0xf]
      %v433 = vld [vmem:[%s361 + $0x1c] sm:$0xf]
      %v434 = vld [vmem:[%s361 + $0x20] sm:$0xf]
      %v435 = vld [vmem:[%s361 + $0x24] sm:$0xf]
      %v436 = vld [vmem:[%s361 + $0x28] sm:$0xf]
      %v437 = vld [vmem:[%s361 + $0x2c] sm:$0xf]
      %v438 = vld [vmem:[%s361 + $0x30] sm:$0xf]
      %v439 = vld [vmem:[%s361 + $0x34] sm:$0xf]
      %v440 = vld [vmem:[%s361 + $0x38] sm:$0xf]
      %v441 = vld [vmem:[%s361 + $0x3c] sm:$0xf]
      %v442 = vld [vmem:[%s381] sm:$0xf]
      %v443 = vld [vmem:[%s381 + $0x4] sm:$0xf]
      %v444 = vld [vmem:[%s381 + $0x8] sm:$0xf]
      %v445 = vld [vmem:[%s381 + $0xc] sm:$0xf]
      %v446 = vld [vmem:[%s381 + $0x10] sm:$0xf]
      %v447 = vld [vmem:[%s381 + $0x14] sm:$0xf]
      %v448 = vld [vmem:[%s381 + $0x18] sm:$0xf]
      %v449 = vld [vmem:[%s381 + $0x1c] sm:$0xf]
      %v450 = vld [vmem:[%s381 + $0x20] sm:$0xf]
      %v451 = vld [vmem:[%s381 + $0x24] sm:$0xf]
      %v452 = vld [vmem:[%s381 + $0x28] sm:$0xf]
      %v453 = vld [vmem:[%s381 + $0x2c] sm:$0xf]
      %v454 = vld [vmem:[%s381 + $0x30] sm:$0xf]
      %v455 = vld [vmem:[%s381 + $0x34] sm:$0xf]
      %v456 = vld [vmem:[%s381 + $0x38] sm:$0xf]
      %v457 = vld [vmem:[%s381 + $0x3c] sm:$0xf]
      %v474 = vunpack.c.l.b16 %v426
      %v475 = vunpack.c.l.b16 %v427
      %v476 = vunpack.c.l.b16 %v428
      %v477 = vunpack.c.l.b16 %v429
      %v478 = vunpack.c.l.b16 %v430
      %v479 = vunpack.c.l.b16 %v431
      %v480 = vunpack.c.l.b16 %v432
      %v481 = vunpack.c.l.b16 %v433
      %v482 = vunpack.c.l.b16 %v434
      %v483 = vunpack.c.l.b16 %v435
      %v484 = vunpack.c.l.b16 %v436
      %v485 = vunpack.c.l.b16 %v437
      %v486 = vunpack.c.l.b16 %v438
      %v487 = vunpack.c.l.b16 %v439
      %v488 = vunpack.c.l.b16 %v440
      %v489 = vunpack.c.l.b16 %v441
      %v490 = vpack.c.b16 %v475, %v474
      %v491 = vpack.c.b16 %v477, %v476
      %v492 = vpack.c.b16 %v479, %v478
      %v493 = vpack.c.b16 %v481, %v480
      %v494 = vpack.c.b16 %v483, %v482
      %v495 = vpack.c.b16 %v485, %v484
      %v496 = vpack.c.b16 %v487, %v486
      %v497 = vpack.c.b16 %v489, %v488
      %v514 = vunpack.c.l.b16 %v442
      %v515 = vunpack.c.l.b16 %v443
      %v516 = vunpack.c.l.b16 %v444
      %v517 = vunpack.c.l.b16 %v445
      %v518 = vunpack.c.l.b16 %v446
      %v519 = vunpack.c.l.b16 %v447
      %v520 = vunpack.c.l.b16 %v448
      %v521 = vunpack.c.l.b16 %v449
      %v522 = vunpack.c.l.b16 %v450
      %v523 = vunpack.c.l.b16 %v451
      %v524 = vunpack.c.l.b16 %v452
      %v525 = vunpack.c.l.b16 %v453
      %v526 = vunpack.c.l.b16 %v454
      %v527 = vunpack.c.l.b16 %v455
      %v528 = vunpack.c.l.b16 %v456
      %v529 = vunpack.c.l.b16 %v457
      %v530 = vpack.c.b16 %v515, %v514
      %v531 = vpack.c.b16 %v517, %v516
      %v532 = vpack.c.b16 %v519, %v518
      %v533 = vpack.c.b16 %v521, %v520
      %v534 = vpack.c.b16 %v523, %v522
      %v535 = vpack.c.b16 %v525, %v524
      %v536 = vpack.c.b16 %v527, %v526
      %v537 = vpack.c.b16 %v529, %v528
      %538 = vrot.lane.b32.xlu0 %v530, 4
      %v539 = vpop.permute.xlu0 %538
      %540 = vrot.lane.b32.xlu0 %v531, 4
      %v541 = vpop.permute.xlu0 %540
      %542 = vrot.lane.b32.xlu0 %v532, 4
      %v543 = vpop.permute.xlu0 %542
      %544 = vrot.lane.b32.xlu0 %v533, 4
      %v545 = vpop.permute.xlu0 %544
      %546 = vrot.lane.b32.xlu0 %v534, 4
      %v547 = vpop.permute.xlu0 %546
      %548 = vrot.lane.b32.xlu0 %v535, 4
      %v549 = vpop.permute.xlu0 %548
      %550 = vrot.lane.b32.xlu0 %v536, 4
      %v551 = vpop.permute.xlu0 %550
      %552 = vrot.lane.b32.xlu0 %v537, 4
      %v553 = vpop.permute.xlu0 %552
      %vm554 = vcmask 31744
      %v557 = vsel %vm554, %v490, %v539
      %v560 = vsel %vm554, %v491, %v541
      %v563 = vsel %vm554, %v492, %v543
      %v566 = vsel %vm554, %v493, %v545
      %v569 = vsel %vm554, %v494, %v547
      %v572 = vsel %vm554, %v495, %v549
      %v575 = vsel %vm554, %v496, %v551
      %v578 = vsel %vm554, %v497, %v553
      %v587 = vrot.slane %v557, 4
      %v588 = vrot.slane %v560, 4
      %v589 = vrot.slane %v563, 4
      %v590 = vrot.slane %v566, 4
      %v591 = vrot.slane %v569, 4
      %v592 = vrot.slane %v572, 4
      %v593 = vrot.slane %v575, 4
      %v594 = vrot.slane %v578, 4
      %s603 = scalar_lea.vmem [#allocation2], 16
      %604 = vst.msk [vmem:[%s603] sm:$0xf0] %vm415, %v587
      %605 = vst.msk [vmem:[%s603 + $0x8] sm:$0xf] %vm404, %v587
      %606 = vst.msk [vmem:[%s603 + $0x10] sm:$0xf0] %vm415, %v588
      %607 = vst.msk [vmem:[%s603 + $0x18] sm:$0xf] %vm404, %v588
      %608 = vst.msk [vmem:[%s603 + $0x20] sm:$0xf0] %vm415, %v589
      %609 = vst.msk [vmem:[%s603 + $0x28] sm:$0xf] %vm404, %v589
      %610 = vst.msk [vmem:[%s603 + $0x30] sm:$0xf0] %vm415, %v590
      %611 = vst.msk [vmem:[%s603 + $0x38] sm:$0xf] %vm404, %v590
      %612 = vst.msk [vmem:[%s603 + $0x40] sm:$0xf0] %vm415, %v591
      %613 = vst.msk [vmem:[%s603 + $0x48] sm:$0xf] %vm404, %v591
      %614 = vst.msk [vmem:[%s603 + $0x50] sm:$0xf0] %vm415, %v592
      %615 = vst.msk [vmem:[%s603 + $0x58] sm:$0xf] %vm404, %v592
      %616 = vst.msk [vmem:[%s603 + $0x60] sm:$0xf0] %vm415, %v593
      %617 = vst.msk [vmem:[%s603 + $0x68] sm:$0xf] %vm404, %v593
      %618 = vst.msk [vmem:[%s603 + $0x70] sm:$0xf0] %vm415, %v594
      %619 = vst.msk [vmem:[%s603 + $0x78] sm:$0xf] %vm404, %v594
      %v620 = vld [vmem:[%s371] sm:$0xf]
      %v621 = vld [vmem:[%s371 + $0x4] sm:$0xf]
      %v622 = vld [vmem:[%s391] sm:$0xf]
      %v623 = vld [vmem:[%s391 + $0x4] sm:$0xf]
      %v626 = vunpack.c.l.b16 %v620
      %v627 = vunpack.c.l.b16 %v621
      %v628 = vpack.c.b16 %v627, %v626
      %v631 = vunpack.c.l.b16 %v622
      %v632 = vunpack.c.l.b16 %v623
      %v633 = vpack.c.b16 %v632, %v631
      %634 = vrot.lane.b32.xlu0 %v633, 4
      %v635 = vpop.permute.xlu0 %634
      %v638 = vsel %vm554, %v628, %v635
      %v640 = vrot.slane %v638, 4
      %642 = vst.msk [vmem:[#allocation2] sm:$0xf0] %vm415, %v640
      %643 = vst.msk [vmem:[#allocation2 + $0x8] sm:$0xf] %vm404, %v640
      %s644 = scalar_lea.vmem %s371, 8
      %v645 = vld [vmem:[%s644] sm:$0xf]
      %v646 = vld [vmem:[%s644 + $0x4] sm:$0xf]
      %s647 = scalar_lea.vmem %s391, 8
      %v648 = vld [vmem:[%s647] sm:$0xf]
      %v649 = vld [vmem:[%s647 + $0x4] sm:$0xf]
      %v652 = vunpack.c.l.b16 %v645
      %v653 = vunpack.c.l.b16 %v646
      %v654 = vpack.c.b16 %v653, %v652
      %v657 = vunpack.c.l.b16 %v648
      %v658 = vunpack.c.l.b16 %v649
      %v659 = vpack.c.b16 %v658, %v657
      %660 = vrot.lane.b32.xlu0 %v659, 4
      %v661 = vpop.permute.xlu0 %660
      %v664 = vsel %vm554, %v654, %v661
      %v666 = vrot.slane %v664, 4
      %s668 = scalar_lea.vmem [#allocation2], 144
      %669 = vst.msk [vmem:[%s668] sm:$0xf0] %vm415, %v666
      %670 = vst.msk [vmem:[%s668 + $0x8] sm:$0xf] %vm404, %v666
      %v671 = vld [vmem:[#allocation2] sm:$0xf8]
      %v672 = vld [vmem:[#allocation2 + $0x8] sm:$0xf]
      %v673 = vld [vmem:[#allocation2 + $0x10] sm:$0xf8]
      %v674 = vld [vmem:[#allocation2 + $0x18] sm:$0xf]
      %v675 = vld [vmem:[#allocation2 + $0x20] sm:$0xf8]
      %v676 = vld [vmem:[#allocation2 + $0x28] sm:$0xf]
      %v677 = vld [vmem:[#allocation2 + $0x30] sm:$0xf8]
      %v678 = vld [vmem:[#allocation2 + $0x38] sm:$0xf]
      %v679 = vld [vmem:[#allocation2 + $0x40] sm:$0xf8]
      %v680 = vld [vmem:[#allocation2 + $0x48] sm:$0xf]
      %v681 = vld [vmem:[#allocation2 + $0x50] sm:$0xf8]
      %v682 = vld [vmem:[#allocation2 + $0x58] sm:$0xf]
      %v683 = vld [vmem:[#allocation2 + $0x60] sm:$0xf8]
      %v684 = vld [vmem:[#allocation2 + $0x68] sm:$0xf]
      %v685 = vld [vmem:[#allocation2 + $0x70] sm:$0xf8]
      %v686 = vld [vmem:[#allocation2 + $0x78] sm:$0xf]
      %v687 = vld [vmem:[#allocation2] sm:$0xf0]
      %v688 = vld [vmem:[#allocation2 + $0x10] sm:$0xf0]
      %v689 = vld [vmem:[#allocation2 + $0x20] sm:$0xf0]
      %v690 = vld [vmem:[#allocation2 + $0x30] sm:$0xf0]
      %v691 = vld [vmem:[#allocation2 + $0x40] sm:$0xf0]
      %v692 = vld [vmem:[#allocation2 + $0x50] sm:$0xf0]
      %v693 = vld [vmem:[#allocation2 + $0x60] sm:$0xf0]
      %v694 = vld [vmem:[#allocation2 + $0x70] sm:$0xf0]
      %v695 = vld [vmem:[#allocation2 + $0x8] sm:$0x1f]
      %v696 = vld [vmem:[#allocation2 + $0x18] sm:$0x1f]
      %v697 = vld [vmem:[#allocation2 + $0x28] sm:$0x1f]
      %v698 = vld [vmem:[#allocation2 + $0x38] sm:$0x1f]
      %v699 = vld [vmem:[#allocation2 + $0x48] sm:$0x1f]
      %v700 = vld [vmem:[#allocation2 + $0x58] sm:$0x1f]
      %v701 = vld [vmem:[#allocation2 + $0x68] sm:$0x1f]
      %v702 = vld [vmem:[#allocation2 + $0x78] sm:$0x1f]
      %v703 = vld [vmem:[%s603] sm:$0xf8]
      %v704 = vld [vmem:[%s603 + $0x8] sm:$0xf]
      %v705 = vld [vmem:[%s603 + $0x10] sm:$0xf8]
      %v706 = vld [vmem:[%s603 + $0x18] sm:$0xf]
      %v707 = vld [vmem:[%s603 + $0x20] sm:$0xf8]
      %v708 = vld [vmem:[%s603 + $0x28] sm:$0xf]
      %v709 = vld [vmem:[%s603 + $0x30] sm:$0xf8]
      %v710 = vld [vmem:[%s603 + $0x38] sm:$0xf]
      %v711 = vld [vmem:[%s603 + $0x40] sm:$0xf8]
      %v712 = vld [vmem:[%s603 + $0x48] sm:$0xf]
      %v713 = vld [vmem:[%s603 + $0x50] sm:$0xf8]
      %v714 = vld [vmem:[%s603 + $0x58] sm:$0xf]
      %v715 = vld [vmem:[%s603 + $0x60] sm:$0xf8]
      %v716 = vld [vmem:[%s603 + $0x68] sm:$0xf]
      %v717 = vld [vmem:[%s603 + $0x70] sm:$0xf8]
      %v718 = vld [vmem:[%s603 + $0x78] sm:$0xf]
      %v719 = vld [vmem:[%s603] sm:$0xf0]
      %v720 = vld [vmem:[%s603 + $0x10] sm:$0xf0]
      %v721 = vld [vmem:[%s603 + $0x20] sm:$0xf0]
      %v722 = vld [vmem:[%s603 + $0x30] sm:$0xf0]
      %v723 = vld [vmem:[%s603 + $0x40] sm:$0xf0]
      %v724 = vld [vmem:[%s603 + $0x50] sm:$0xf0]
      %v725 = vld [vmem:[%s603 + $0x60] sm:$0xf0]
      %v726 = vld [vmem:[%s603 + $0x70] sm:$0xf0]
      %v727 = vld [vmem:[%s603 + $0x8] sm:$0x1f]
      %v728 = vld [vmem:[%s603 + $0x18] sm:$0x1f]
      %v729 = vld [vmem:[%s603 + $0x28] sm:$0x1f]
      %v730 = vld [vmem:[%s603 + $0x38] sm:$0x1f]
      %v731 = vld [vmem:[%s603 + $0x48] sm:$0x1f]
      %v732 = vld [vmem:[%s603 + $0x58] sm:$0x1f]
      %v733 = vld [vmem:[%s603 + $0x68] sm:$0x1f]
      %v734 = vld [vmem:[%s603 + $0x78] sm:$0x1f]
      %s735 = scalar_lea.vmem [#allocation2], 32
      %v736 = vld [vmem:[%s735] sm:$0xf8]
      %v737 = vld [vmem:[%s735 + $0x8] sm:$0xf]
      %v738 = vld [vmem:[%s735 + $0x10] sm:$0xf8]
      %v739 = vld [vmem:[%s735 + $0x18] sm:$0xf]
      %v740 = vld [vmem:[%s735 + $0x20] sm:$0xf8]
      %v741 = vld [vmem:[%s735 + $0x28] sm:$0xf]
      %v742 = vld [vmem:[%s735 + $0x30] sm:$0xf8]
      %v743 = vld [vmem:[%s735 + $0x38] sm:$0xf]
      %v744 = vld [vmem:[%s735 + $0x40] sm:$0xf8]
      %v745 = vld [vmem:[%s735 + $0x48] sm:$0xf]
      %v746 = vld [vmem:[%s735 + $0x50] sm:$0xf8]
      %v747 = vld [vmem:[%s735 + $0x58] sm:$0xf]
      %v748 = vld [vmem:[%s735 + $0x60] sm:$0xf8]
      %v749 = vld [vmem:[%s735 + $0x68] sm:$0xf]
      %v750 = vld [vmem:[%s735 + $0x70] sm:$0xf8]
      %v751 = vld [vmem:[%s735 + $0x78] sm:$0xf]
      %v752 = vld [vmem:[%s735] sm:$0xf0]
      %v753 = vld [vmem:[%s735 + $0x10] sm:$0xf0]
      %v754 = vld [vmem:[%s735 + $0x20] sm:$0xf0]
      %v755 = vld [vmem:[%s735 + $0x30] sm:$0xf0]
      %v756 = vld [vmem:[%s735 + $0x40] sm:$0xf0]
      %v757 = vld [vmem:[%s735 + $0x50] sm:$0xf0]
      %v758 = vld [vmem:[%s735 + $0x60] sm:$0xf0]
      %v759 = vld [vmem:[%s735 + $0x70] sm:$0xf0]
      %v760 = vld [vmem:[%s735 + $0x8] sm:$0x1f]
      %v761 = vld [vmem:[%s735 + $0x18] sm:$0x1f]
      %v762 = vld [vmem:[%s735 + $0x28] sm:$0x1f]
      %v763 = vld [vmem:[%s735 + $0x38] sm:$0x1f]
      %v764 = vld [vmem:[%s735 + $0x48] sm:$0x1f]
      %v765 = vld [vmem:[%s735 + $0x58] sm:$0x1f]
      %v766 = vld [vmem:[%s735 + $0x68] sm:$0x1f]
      %v767 = vld [vmem:[%s735 + $0x78] sm:$0x1f]
      %vm768 = vsmask.f32 7424
      %v770 = vshrl.u32 %v687, 16
      %v772 = vshll.u32 %v687, 16
      %v774 = vrot.slane %v772, 1
      %v775 = vor.u32 %v770, %v774
      %v777 = vshll.u32 %v672, 16
      %v779 = vrot.slane %v777, 1
      %v780 = vsel %vm768, %v775, %v779
      %v781 = vshrl.u32 %v672, 16
      %v783 = vor.u32 %v781, %v779
      %v785 = vshrl.u32 %v688, 16
      %v787 = vshll.u32 %v688, 16
      %v789 = vrot.slane %v787, 1
      %v790 = vor.u32 %v785, %v789
      %v792 = vshll.u32 %v674, 16
      %v794 = vrot.slane %v792, 1
      %v795 = vsel %vm768, %v790, %v794
      %v796 = vshrl.u32 %v674, 16
      %v798 = vor.u32 %v796, %v794
      %v800 = vshrl.u32 %v689, 16
      %v802 = vshll.u32 %v689, 16
      %v804 = vrot.slane %v802, 1
      %v805 = vor.u32 %v800, %v804
      %v807 = vshll.u32 %v676, 16
      %v809 = vrot.slane %v807, 1
      %v810 = vsel %vm768, %v805, %v809
      %v811 = vshrl.u32 %v676, 16
      %v813 = vor.u32 %v811, %v809
      %v815 = vshrl.u32 %v690, 16
      %v817 = vshll.u32 %v690, 16
      %v819 = vrot.slane %v817, 1
      %v820 = vor.u32 %v815, %v819
      %v822 = vshll.u32 %v678, 16
      %v824 = vrot.slane %v822, 1
      %v825 = vsel %vm768, %v820, %v824
      %v826 = vshrl.u32 %v678, 16
      %v828 = vor.u32 %v826, %v824
      %v830 = vshrl.u32 %v691, 16
      %v832 = vshll.u32 %v691, 16
      %v834 = vrot.slane %v832, 1
      %v835 = vor.u32 %v830, %v834
      %v837 = vshll.u32 %v680, 16
      %v839 = vrot.slane %v837, 1
      %v840 = vsel %vm768, %v835, %v839
      %v841 = vshrl.u32 %v680, 16
      %v843 = vor.u32 %v841, %v839
      %v845 = vshrl.u32 %v692, 16
      %v847 = vshll.u32 %v692, 16
      %v849 = vrot.slane %v847, 1
      %v850 = vor.u32 %v845, %v849
      %v852 = vshll.u32 %v682, 16
      %v854 = vrot.slane %v852, 1
      %v855 = vsel %vm768, %v850, %v854
      %v856 = vshrl.u32 %v682, 16
      %v858 = vor.u32 %v856, %v854
      %v860 = vshrl.u32 %v693, 16
      %v862 = vshll.u32 %v693, 16
      %v864 = vrot.slane %v862, 1
      %v865 = vor.u32 %v860, %v864
      %v867 = vshll.u32 %v684, 16
      %v869 = vrot.slane %v867, 1
      %v870 = vsel %vm768, %v865, %v869
      %v871 = vshrl.u32 %v684, 16
      %v873 = vor.u32 %v871, %v869
      %v875 = vshrl.u32 %v694, 16
      %v877 = vshll.u32 %v694, 16
      %v879 = vrot.slane %v877, 1
      %v880 = vor.u32 %v875, %v879
      %v882 = vshll.u32 %v686, 16
      %v884 = vrot.slane %v882, 1
      %v885 = vsel %vm768, %v880, %v884
      %v886 = vshrl.u32 %v686, 16
      %v888 = vor.u32 %v886, %v884
      %889 = vrot.lane.b32.xlu0 %v780, 8
      %v890 = vpop.permute.xlu0 %889
      %891 = vrot.lane.b32.xlu0 %v783, 8
      %v892 = vpop.permute.xlu0 %891
      %893 = vrot.lane.b32.xlu0 %v795, 8
      %v894 = vpop.permute.xlu0 %893
      %895 = vrot.lane.b32.xlu0 %v798, 8
      %v896 = vpop.permute.xlu0 %895
      %897 = vrot.lane.b32.xlu0 %v810, 8
      %v898 = vpop.permute.xlu0 %897
      %899 = vrot.lane.b32.xlu0 %v813, 8
      %v900 = vpop.permute.xlu0 %899
      %901 = vrot.lane.b32.xlu0 %v825, 8
      %v902 = vpop.permute.xlu0 %901
      %903 = vrot.lane.b32.xlu0 %v828, 8
      %v904 = vpop.permute.xlu0 %903
      %905 = vrot.lane.b32.xlu0 %v840, 8
      %v906 = vpop.permute.xlu0 %905
      %907 = vrot.lane.b32.xlu0 %v843, 8
      %v908 = vpop.permute.xlu0 %907
      %909 = vrot.lane.b32.xlu0 %v855, 8
      %v910 = vpop.permute.xlu0 %909
      %911 = vrot.lane.b32.xlu0 %v858, 8
      %v912 = vpop.permute.xlu0 %911
      %913 = vrot.lane.b32.xlu0 %v870, 8
      %v914 = vpop.permute.xlu0 %913
      %915 = vrot.lane.b32.xlu0 %v873, 8
      %v916 = vpop.permute.xlu0 %915
      %917 = vrot.lane.b32.xlu0 %v885, 8
      %v918 = vpop.permute.xlu0 %917
      %919 = vrot.lane.b32.xlu0 %v888, 8
      %v920 = vpop.permute.xlu0 %919
      %vm937 = vcmask 1046528
      %v938 = vrot.slane %v687, 1
      %v939 = vrot.slane %v695, 1
      %v940 = vsel %vm937, %v938, %v939
      %v941 = vrot.slane %v688, 1
      %v942 = vrot.slane %v696, 1
      %v943 = vsel %vm937, %v941, %v942
      %v944 = vrot.slane %v689, 1
      %v945 = vrot.slane %v697, 1
      %v946 = vsel %vm937, %v944, %v945
      %v947 = vrot.slane %v690, 1
      %v948 = vrot.slane %v698, 1
      %v949 = vsel %vm937, %v947, %v948
      %v950 = vrot.slane %v691, 1
      %v951 = vrot.slane %v699, 1
      %v952 = vsel %vm937, %v950, %v951
      %v953 = vrot.slane %v692, 1
      %v954 = vrot.slane %v700, 1
      %v955 = vsel %vm937, %v953, %v954
      %v956 = vrot.slane %v693, 1
      %v957 = vrot.slane %v701, 1
      %v958 = vsel %vm937, %v956, %v957
      %v959 = vrot.slane %v694, 1
      %v960 = vrot.slane %v702, 1
      %v961 = vsel %vm937, %v959, %v960
      %962 = vrot.lane.b32.xlu0 %v940, 16
      %v963 = vpop.permute.xlu0 %962
      %964 = vrot.lane.b32.xlu0 %v939, 16
      %v965 = vpop.permute.xlu0 %964
      %966 = vrot.lane.b32.xlu0 %v943, 16
      %v967 = vpop.permute.xlu0 %966
      %968 = vrot.lane.b32.xlu0 %v942, 16
      %v969 = vpop.permute.xlu0 %968
      %970 = vrot.lane.b32.xlu0 %v946, 16
      %v971 = vpop.permute.xlu0 %970
      %972 = vrot.lane.b32.xlu0 %v945, 16
      %v973 = vpop.permute.xlu0 %972
      %974 = vrot.lane.b32.xlu0 %v949, 16
      %v975 = vpop.permute.xlu0 %974
      %976 = vrot.lane.b32.xlu0 %v948, 16
      %v977 = vpop.permute.xlu0 %976
      %978 = vrot.lane.b32.xlu0 %v952, 16
      %v979 = vpop.permute.xlu0 %978
      %980 = vrot.lane.b32.xlu0 %v951, 16
      %v981 = vpop.permute.xlu0 %980
      %982 = vrot.lane.b32.xlu0 %v955, 16
      %v983 = vpop.permute.xlu0 %982
      %984 = vrot.lane.b32.xlu0 %v954, 16
      %v985 = vpop.permute.xlu0 %984
      %986 = vrot.lane.b32.xlu0 %v958, 16
      %v987 = vpop.permute.xlu0 %986
      %988 = vrot.lane.b32.xlu0 %v957, 16
      %v989 = vpop.permute.xlu0 %988
      %990 = vrot.lane.b32.xlu0 %v961, 16
      %v991 = vpop.permute.xlu0 %990
      %992 = vrot.lane.b32.xlu0 %v960, 16
      %v993 = vpop.permute.xlu0 %992
      %1010 = vrot.lane.b32.xlu0 %v703, 24
      %v1011 = vpop.permute.xlu0 %1010
      %1012 = vrot.lane.b32.xlu0 %v704, 24
      %v1013 = vpop.permute.xlu0 %1012
      %1014 = vrot.lane.b32.xlu0 %v705, 24
      %v1015 = vpop.permute.xlu0 %1014
      %1016 = vrot.lane.b32.xlu0 %v706, 24
      %v1017 = vpop.permute.xlu0 %1016
      %1018 = vrot.lane.b32.xlu0 %v707, 24
      %v1019 = vpop.permute.xlu0 %1018
      %1020 = vrot.lane.b32.xlu0 %v708, 24
      %v1021 = vpop.permute.xlu0 %1020
      %1022 = vrot.lane.b32.xlu0 %v709, 24
      %v1023 = vpop.permute.xlu0 %1022
      %1024 = vrot.lane.b32.xlu0 %v710, 24
      %v1025 = vpop.permute.xlu0 %1024
      %1026 = vrot.lane.b32.xlu0 %v711, 24
      %v1027 = vpop.permute.xlu0 %1026
      %1028 = vrot.lane.b32.xlu0 %v712, 24
      %v1029 = vpop.permute.xlu0 %1028
      %1030 = vrot.lane.b32.xlu0 %v713, 24
      %v1031 = vpop.permute.xlu0 %1030
      %1032 = vrot.lane.b32.xlu0 %v714, 24
      %v1033 = vpop.permute.xlu0 %1032
      %1034 = vrot.lane.b32.xlu0 %v715, 24
      %v1035 = vpop.permute.xlu0 %1034
      %1036 = vrot.lane.b32.xlu0 %v716, 24
      %v1037 = vpop.permute.xlu0 %1036
      %1038 = vrot.lane.b32.xlu0 %v717, 24
      %v1039 = vpop.permute.xlu0 %1038
      %1040 = vrot.lane.b32.xlu0 %v718, 24
      %v1041 = vpop.permute.xlu0 %1040
      %v1043 = vshrl.u32 %v719, 16
      %v1045 = vshll.u32 %v719, 16
      %v1047 = vrot.slane %v1045, 1
      %v1048 = vor.u32 %v1043, %v1047
      %v1050 = vshll.u32 %v704, 16
      %v1052 = vrot.slane %v1050, 1
      %v1053 = vsel %vm768, %v1048, %v1052
      %v1054 = vshrl.u32 %v704, 16
      %v1056 = vor.u32 %v1054, %v1052
      %v1058 = vshrl.u32 %v720, 16
      %v1060 = vshll.u32 %v720, 16
      %v1062 = vrot.slane %v1060, 1
      %v1063 = vor.u32 %v1058, %v1062
      %v1065 = vshll.u32 %v706, 16
      %v1067 = vrot.slane %v1065, 1
      %v1068 = vsel %vm768, %v1063, %v1067
      %v1069 = vshrl.u32 %v706, 16
      %v1071 = vor.u32 %v1069, %v1067
      %v1073 = vshrl.u32 %v721, 16
      %v1075 = vshll.u32 %v721, 16
      %v1077 = vrot.slane %v1075, 1
      %v1078 = vor.u32 %v1073, %v1077
      %v1080 = vshll.u32 %v708, 16
      %v1082 = vrot.slane %v1080, 1
      %v1083 = vsel %vm768, %v1078, %v1082
      %v1084 = vshrl.u32 %v708, 16
      %v1086 = vor.u32 %v1084, %v1082
      %v1088 = vshrl.u32 %v722, 16
      %v1090 = vshll.u32 %v722, 16
      %v1092 = vrot.slane %v1090, 1
      %v1093 = vor.u32 %v1088, %v1092
      %v1095 = vshll.u32 %v710, 16
      %v1097 = vrot.slane %v1095, 1
      %v1098 = vsel %vm768, %v1093, %v1097
      %v1099 = vshrl.u32 %v710, 16
      %v1101 = vor.u32 %v1099, %v1097
      %v1103 = vshrl.u32 %v723, 16
      %v1105 = vshll.u32 %v723, 16
      %v1107 = vrot.slane %v1105, 1
      %v1108 = vor.u32 %v1103, %v1107
      %v1110 = vshll.u32 %v712, 16
      %v1112 = vrot.slane %v1110, 1
      %v1113 = vsel %vm768, %v1108, %v1112
      %v1114 = vshrl.u32 %v712, 16
      %v1116 = vor.u32 %v1114, %v1112
      %v1118 = vshrl.u32 %v724, 16
      %v1120 = vshll.u32 %v724, 16
      %v1122 = vrot.slane %v1120, 1
      %v1123 = vor.u32 %v1118, %v1122
      %v1125 = vshll.u32 %v714, 16
      %v1127 = vrot.slane %v1125, 1
      %v1128 = vsel %vm768, %v1123, %v1127
      %v1129 = vshrl.u32 %v714, 16
      %v1131 = vor.u32 %v1129, %v1127
      %v1133 = vshrl.u32 %v725, 16
      %v1135 = vshll.u32 %v725, 16
      %v1137 = vrot.slane %v1135, 1
      %v1138 = vor.u32 %v1133, %v1137
      %v1140 = vshll.u32 %v716, 16
      %v1142 = vrot.slane %v1140, 1
      %v1143 = vsel %vm768, %v1138, %v1142
      %v1144 = vshrl.u32 %v716, 16
      %v1146 = vor.u32 %v1144, %v1142
      %v1148 = vshrl.u32 %v726, 16
      %v1150 = vshll.u32 %v726, 16
      %v1152 = vrot.slane %v1150, 1
      %v1153 = vor.u32 %v1148, %v1152
      %v1155 = vshll.u32 %v718, 16
      %v1157 = vrot.slane %v1155, 1
      %v1158 = vsel %vm768, %v1153, %v1157
      %v1159 = vshrl.u32 %v718, 16
      %v1161 = vor.u32 %v1159, %v1157
      %1162 = vrot.lane.b32.xlu0 %v1053, 32
      %v1163 = vpop.permute.xlu0 %1162
      %1164 = vrot.lane.b32.xlu0 %v1056, 32
      %v1165 = vpop.permute.xlu0 %1164
      %1166 = vrot.lane.b32.xlu0 %v1068, 32
      %v1167 = vpop.permute.xlu0 %1166
      %1168 = vrot.lane.b32.xlu0 %v1071, 32
      %v1169 = vpop.permute.xlu0 %1168
      %1170 = vrot.lane.b32.xlu0 %v1083, 32
      %v1171 = vpop.permute.xlu0 %1170
      %1172 = vrot.lane.b32.xlu0 %v1086, 32
      %v1173 = vpop.permute.xlu0 %1172
      %1174 = vrot.lane.b32.xlu0 %v1098, 32
      %v1175 = vpop.permute.xlu0 %1174
      %1176 = vrot.lane.b32.xlu0 %v1101, 32
      %v1177 = vpop.permute.xlu0 %1176
      %1178 = vrot.lane.b32.xlu0 %v1113, 32
      %v1179 = vpop.permute.xlu0 %1178
      %1180 = vrot.lane.b32.xlu0 %v1116, 32
      %v1181 = vpop.permute.xlu0 %1180
      %1182 = vrot.lane.b32.xlu0 %v1128, 32
      %v1183 = vpop.permute.xlu0 %1182
      %1184 = vrot.lane.b32.xlu0 %v1131, 32
      %v1185 = vpop.permute.xlu0 %1184
      %1186 = vrot.lane.b32.xlu0 %v1143, 32
      %v1187 = vpop.permute.xlu0 %1186
      %1188 = vrot.lane.b32.xlu0 %v1146, 32
      %v1189 = vpop.permute.xlu0 %1188
      %1190 = vrot.lane.b32.xlu0 %v1158, 32
      %v1191 = vpop.permute.xlu0 %1190
      %1192 = vrot.lane.b32.xlu0 %v1161, 32
      %v1193 = vpop.permute.xlu0 %1192
      %v1210 = vrot.slane %v719, 1
      %v1211 = vrot.slane %v727, 1
      %v1212 = vsel %vm937, %v1210, %v1211
      %v1213 = vrot.slane %v720, 1
      %v1214 = vrot.slane %v728, 1
      %v1215 = vsel %vm937, %v1213, %v1214
      %v1216 = vrot.slane %v721, 1
      %v1217 = vrot.slane %v729, 1
      %v1218 = vsel %vm937, %v1216, %v1217
      %v1219 = vrot.slane %v722, 1
      %v1220 = vrot.slane %v730, 1
      %v1221 = vsel %vm937, %v1219, %v1220
      %v1222 = vrot.slane %v723, 1
      %v1223 = vrot.slane %v731, 1
      %v1224 = vsel %vm937, %v1222, %v1223
      %v1225 = vrot.slane %v724, 1
      %v1226 = vrot.slane %v732, 1
      %v1227 = vsel %vm937, %v1225, %v1226
      %v1228 = vrot.slane %v725, 1
      %v1229 = vrot.slane %v733, 1
      %v1230 = vsel %vm937, %v1228, %v1229
      %v1231 = vrot.slane %v726, 1
      %v1232 = vrot.slane %v734, 1
      %v1233 = vsel %vm937, %v1231, %v1232
      %1234 = vrot.lane.b32.xlu0 %v1212, 40
      %v1235 = vpop.permute.xlu0 %1234
      %1236 = vrot.lane.b32.xlu0 %v1211, 40
      %v1237 = vpop.permute.xlu0 %1236
      %1238 = vrot.lane.b32.xlu0 %v1215, 40
      %v1239 = vpop.permute.xlu0 %1238
      %1240 = vrot.lane.b32.xlu0 %v1214, 40
      %v1241 = vpop.permute.xlu0 %1240
      %1242 = vrot.lane.b32.xlu0 %v1218, 40
      %v1243 = vpop.permute.xlu0 %1242
      %1244 = vrot.lane.b32.xlu0 %v1217, 40
      %v1245 = vpop.permute.xlu0 %1244
      %1246 = vrot.lane.b32.xlu0 %v1221, 40
      %v1247 = vpop.permute.xlu0 %1246
      %1248 = vrot.lane.b32.xlu0 %v1220, 40
      %v1249 = vpop.permute.xlu0 %1248
      %1250 = vrot.lane.b32.xlu0 %v1224, 40
      %v1251 = vpop.permute.xlu0 %1250
      %1252 = vrot.lane.b32.xlu0 %v1223, 40
      %v1253 = vpop.permute.xlu0 %1252
      %1254 = vrot.lane.b32.xlu0 %v1227, 40
      %v1255 = vpop.permute.xlu0 %1254
      %1256 = vrot.lane.b32.xlu0 %v1226, 40
      %v1257 = vpop.permute.xlu0 %1256
      %1258 = vrot.lane.b32.xlu0 %v1230, 40
      %v1259 = vpop.permute.xlu0 %1258
      %1260 = vrot.lane.b32.xlu0 %v1229, 40
      %v1261 = vpop.permute.xlu0 %1260
      %1262 = vrot.lane.b32.xlu0 %v1233, 40
      %v1263 = vpop.permute.xlu0 %1262
      %1264 = vrot.lane.b32.xlu0 %v1232, 40
      %v1265 = vpop.permute.xlu0 %1264
      %1282 = vrot.lane.b32.xlu0 %v736, 48
      %v1283 = vpop.permute.xlu0 %1282
      %1284 = vrot.lane.b32.xlu0 %v737, 48
      %v1285 = vpop.permute.xlu0 %1284
      %1286 = vrot.lane.b32.xlu0 %v738, 48
      %v1287 = vpop.permute.xlu0 %1286
      %1288 = vrot.lane.b32.xlu0 %v739, 48
      %v1289 = vpop.permute.xlu0 %1288
      %1290 = vrot.lane.b32.xlu0 %v740, 48
      %v1291 = vpop.permute.xlu0 %1290
      %1292 = vrot.lane.b32.xlu0 %v741, 48
      %v1293 = vpop.permute.xlu0 %1292
      %1294 = vrot.lane.b32.xlu0 %v742, 48
      %v1295 = vpop.permute.xlu0 %1294
      %1296 = vrot.lane.b32.xlu0 %v743, 48
      %v1297 = vpop.permute.xlu0 %1296
      %1298 = vrot.lane.b32.xlu0 %v744, 48
      %v1299 = vpop.permute.xlu0 %1298
      %1300 = vrot.lane.b32.xlu0 %v745, 48
      %v1301 = vpop.permute.xlu0 %1300
      %1302 = vrot.lane.b32.xlu0 %v746, 48
      %v1303 = vpop.permute.xlu0 %1302
      %1304 = vrot.lane.b32.xlu0 %v747, 48
      %v1305 = vpop.permute.xlu0 %1304
      %1306 = vrot.lane.b32.xlu0 %v748, 48
      %v1307 = vpop.permute.xlu0 %1306
      %1308 = vrot.lane.b32.xlu0 %v749, 48
      %v1309 = vpop.permute.xlu0 %1308
      %1310 = vrot.lane.b32.xlu0 %v750, 48
      %v1311 = vpop.permute.xlu0 %1310
      %1312 = vrot.lane.b32.xlu0 %v751, 48
      %v1313 = vpop.permute.xlu0 %1312
      %v1315 = vshrl.u32 %v752, 16
      %v1317 = vshll.u32 %v752, 16
      %v1319 = vrot.slane %v1317, 1
      %v1320 = vor.u32 %v1315, %v1319
      %v1322 = vshll.u32 %v737, 16
      %v1324 = vrot.slane %v1322, 1
      %v1325 = vsel %vm768, %v1320, %v1324
      %v1326 = vshrl.u32 %v737, 16
      %v1328 = vor.u32 %v1326, %v1324
      %v1330 = vshrl.u32 %v753, 16
      %v1332 = vshll.u32 %v753, 16
      %v1334 = vrot.slane %v1332, 1
      %v1335 = vor.u32 %v1330, %v1334
      %v1337 = vshll.u32 %v739, 16
      %v1339 = vrot.slane %v1337, 1
      %v1340 = vsel %vm768, %v1335, %v1339
      %v1341 = vshrl.u32 %v739, 16
      %v1343 = vor.u32 %v1341, %v1339
      %v1345 = vshrl.u32 %v754, 16
      %v1347 = vshll.u32 %v754, 16
      %v1349 = vrot.slane %v1347, 1
      %v1350 = vor.u32 %v1345, %v1349
      %v1352 = vshll.u32 %v741, 16
      %v1354 = vrot.slane %v1352, 1
      %v1355 = vsel %vm768, %v1350, %v1354
      %v1356 = vshrl.u32 %v741, 16
      %v1358 = vor.u32 %v1356, %v1354
      %v1360 = vshrl.u32 %v755, 16
      %v1362 = vshll.u32 %v755, 16
      %v1364 = vrot.slane %v1362, 1
      %v1365 = vor.u32 %v1360, %v1364
      %v1367 = vshll.u32 %v743, 16
      %v1369 = vrot.slane %v1367, 1
      %v1370 = vsel %vm768, %v1365, %v1369
      %v1371 = vshrl.u32 %v743, 16
      %v1373 = vor.u32 %v1371, %v1369
      %v1375 = vshrl.u32 %v756, 16
      %v1377 = vshll.u32 %v756, 16
      %v1379 = vrot.slane %v1377, 1
      %v1380 = vor.u32 %v1375, %v1379
      %v1382 = vshll.u32 %v745, 16
      %v1384 = vrot.slane %v1382, 1
      %v1385 = vsel %vm768, %v1380, %v1384
      %v1386 = vshrl.u32 %v745, 16
      %v1388 = vor.u32 %v1386, %v1384
      %v1390 = vshrl.u32 %v757, 16
      %v1392 = vshll.u32 %v757, 16
      %v1394 = vrot.slane %v1392, 1
      %v1395 = vor.u32 %v1390, %v1394
      %v1397 = vshll.u32 %v747, 16
      %v1399 = vrot.slane %v1397, 1
      %v1400 = vsel %vm768, %v1395, %v1399
      %v1401 = vshrl.u32 %v747, 16
      %v1403 = vor.u32 %v1401, %v1399
      %v1405 = vshrl.u32 %v758, 16
      %v1407 = vshll.u32 %v758, 16
      %v1409 = vrot.slane %v1407, 1
      %v1410 = vor.u32 %v1405, %v1409
      %v1412 = vshll.u32 %v749, 16
      %v1414 = vrot.slane %v1412, 1
      %v1415 = vsel %vm768, %v1410, %v1414
      %v1416 = vshrl.u32 %v749, 16
      %v1418 = vor.u32 %v1416, %v1414
      %v1420 = vshrl.u32 %v759, 16
      %v1422 = vshll.u32 %v759, 16
      %v1424 = vrot.slane %v1422, 1
      %v1425 = vor.u32 %v1420, %v1424
      %v1427 = vshll.u32 %v751, 16
      %v1429 = vrot.slane %v1427, 1
      %v1430 = vsel %vm768, %v1425, %v1429
      %v1431 = vshrl.u32 %v751, 16
      %v1433 = vor.u32 %v1431, %v1429
      %1434 = vrot.lane.b32.xlu0 %v1325, 56
      %v1435 = vpop.permute.xlu0 %1434
      %1436 = vrot.lane.b32.xlu0 %v1328, 56
      %v1437 = vpop.permute.xlu0 %1436
      %1438 = vrot.lane.b32.xlu0 %v1340, 56
      %v1439 = vpop.permute.xlu0 %1438
      %1440 = vrot.lane.b32.xlu0 %v1343, 56
      %v1441 = vpop.permute.xlu0 %1440
      %1442 = vrot.lane.b32.xlu0 %v1355, 56
      %v1443 = vpop.permute.xlu0 %1442
      %1444 = vrot.lane.b32.xlu0 %v1358, 56
      %v1445 = vpop.permute.xlu0 %1444
      %1446 = vrot.lane.b32.xlu0 %v1370, 56
      %v1447 = vpop.permute.xlu0 %1446
      %1448 = vrot.lane.b32.xlu0 %v1373, 56
      %v1449 = vpop.permute.xlu0 %1448
      %1450 = vrot.lane.b32.xlu0 %v1385, 56
      %v1451 = vpop.permute.xlu0 %1450
      %1452 = vrot.lane.b32.xlu0 %v1388, 56
      %v1453 = vpop.permute.xlu0 %1452
      %1454 = vrot.lane.b32.xlu0 %v1400, 56
      %v1455 = vpop.permute.xlu0 %1454
      %1456 = vrot.lane.b32.xlu0 %v1403, 56
      %v1457 = vpop.permute.xlu0 %1456
      %1458 = vrot.lane.b32.xlu0 %v1415, 56
      %v1459 = vpop.permute.xlu0 %1458
      %1460 = vrot.lane.b32.xlu0 %v1418, 56
      %v1461 = vpop.permute.xlu0 %1460
      %1462 = vrot.lane.b32.xlu0 %v1430, 56
      %v1463 = vpop.permute.xlu0 %1462
      %1464 = vrot.lane.b32.xlu0 %v1433, 56
      %v1465 = vpop.permute.xlu0 %1464
      %v1482 = vrot.slane %v752, 1
      %v1483 = vrot.slane %v760, 1
      %v1484 = vsel %vm937, %v1482, %v1483
      %v1485 = vrot.slane %v753, 1
      %v1486 = vrot.slane %v761, 1
      %v1487 = vsel %vm937, %v1485, %v1486
      %v1488 = vrot.slane %v754, 1
      %v1489 = vrot.slane %v762, 1
      %v1490 = vsel %vm937, %v1488, %v1489
      %v1491 = vrot.slane %v755, 1
      %v1492 = vrot.slane %v763, 1
      %v1493 = vsel %vm937, %v1491, %v1492
      %v1494 = vrot.slane %v756, 1
      %v1495 = vrot.slane %v764, 1
      %v1496 = vsel %vm937, %v1494, %v1495
      %v1497 = vrot.slane %v757, 1
      %v1498 = vrot.slane %v765, 1
      %v1499 = vsel %vm937, %v1497, %v1498
      %v1500 = vrot.slane %v758, 1
      %v1501 = vrot.slane %v766, 1
      %v1502 = vsel %vm937, %v1500, %v1501
      %v1503 = vrot.slane %v759, 1
      %v1504 = vrot.slane %v767, 1
      %v1505 = vsel %vm937, %v1503, %v1504
      %1506 = vrot.lane.b32.xlu0 %v1484, 64
      %v1507 = vpop.permute.xlu0 %1506
      %1508 = vrot.lane.b32.xlu0 %v1483, 64
      %v1509 = vpop.permute.xlu0 %1508
      %1510 = vrot.lane.b32.xlu0 %v1487, 64
      %v1511 = vpop.permute.xlu0 %1510
      %1512 = vrot.lane.b32.xlu0 %v1486, 64
      %v1513 = vpop.permute.xlu0 %1512
      %1514 = vrot.lane.b32.xlu0 %v1490, 64
      %v1515 = vpop.permute.xlu0 %1514
      %1516 = vrot.lane.b32.xlu0 %v1489, 64
      %v1517 = vpop.permute.xlu0 %1516
      %1518 = vrot.lane.b32.xlu0 %v1493, 64
      %v1519 = vpop.permute.xlu0 %1518
      %1520 = vrot.lane.b32.xlu0 %v1492, 64
      %v1521 = vpop.permute.xlu0 %1520
      %1522 = vrot.lane.b32.xlu0 %v1496, 64
      %v1523 = vpop.permute.xlu0 %1522
      %1524 = vrot.lane.b32.xlu0 %v1495, 64
      %v1525 = vpop.permute.xlu0 %1524
      %1526 = vrot.lane.b32.xlu0 %v1499, 64
      %v1527 = vpop.permute.xlu0 %1526
      %1528 = vrot.lane.b32.xlu0 %v1498, 64
      %v1529 = vpop.permute.xlu0 %1528
      %1530 = vrot.lane.b32.xlu0 %v1502, 64
      %v1531 = vpop.permute.xlu0 %1530
      %1532 = vrot.lane.b32.xlu0 %v1501, 64
      %v1533 = vpop.permute.xlu0 %1532
      %1534 = vrot.lane.b32.xlu0 %v1505, 64
      %v1535 = vpop.permute.xlu0 %1534
      %1536 = vrot.lane.b32.xlu0 %v1504, 64
      %v1537 = vpop.permute.xlu0 %1536
      %vm1538 = vcmask 64512
      %v1541 = vsel %vm1538, %v671, %v890
      %v1543 = vsel %vm1538, %v672, %v892
      %v1546 = vsel %vm1538, %v673, %v894
      %v1548 = vsel %vm1538, %v674, %v896
      %v1551 = vsel %vm1538, %v675, %v898
      %v1553 = vsel %vm1538, %v676, %v900
      %v1556 = vsel %vm1538, %v677, %v902
      %v1558 = vsel %vm1538, %v678, %v904
      %v1561 = vsel %vm1538, %v679, %v906
      %v1563 = vsel %vm1538, %v680, %v908
      %v1566 = vsel %vm1538, %v681, %v910
      %v1568 = vsel %vm1538, %v682, %v912
      %v1571 = vsel %vm1538, %v683, %v914
      %v1573 = vsel %vm1538, %v684, %v916
      %v1576 = vsel %vm1538, %v685, %v918
      %v1578 = vsel %vm1538, %v686, %v920
      %vm1579 = vcmask 130048
      %v1581 = vsel %vm1579, %v1541, %v963
      %v1583 = vsel %vm1579, %v1543, %v965
      %v1585 = vsel %vm1579, %v1546, %v967
      %v1587 = vsel %vm1579, %v1548, %v969
      %v1589 = vsel %vm1579, %v1551, %v971
      %v1591 = vsel %vm1579, %v1553, %v973
      %v1593 = vsel %vm1579, %v1556, %v975
      %v1595 = vsel %vm1579, %v1558, %v977
      %v1597 = vsel %vm1579, %v1561, %v979
      %v1599 = vsel %vm1579, %v1563, %v981
      %v1601 = vsel %vm1579, %v1566, %v983
      %v1603 = vsel %vm1579, %v1568, %v985
      %v1605 = vsel %vm1579, %v1571, %v987
      %v1607 = vsel %vm1579, %v1573, %v989
      %v1609 = vsel %vm1579, %v1576, %v991
      %v1611 = vsel %vm1579, %v1578, %v993
      %vm1612 = vcmask 195584
      %v1614 = vsel %vm1612, %v1581, %v1011
      %v1616 = vsel %vm1612, %v1583, %v1013
      %v1618 = vsel %vm1612, %v1585, %v1015
      %v1620 = vsel %vm1612, %v1587, %v1017
      %v1622 = vsel %vm1612, %v1589, %v1019
      %v1624 = vsel %vm1612, %v1591, %v1021
      %v1626 = vsel %vm1612, %v1593, %v1023
      %v1628 = vsel %vm1612, %v1595, %v1025
      %v1630 = vsel %vm1612, %v1597, %v1027
      %v1632 = vsel %vm1612, %v1599, %v1029
      %v1634 = vsel %vm1612, %v1601, %v1031
      %v1636 = vsel %vm1612, %v1603, %v1033
      %v1638 = vsel %vm1612, %v1605, %v1035
      %v1640 = vsel %vm1612, %v1607, %v1037
      %v1642 = vsel %vm1612, %v1609, %v1039
      %v1644 = vsel %vm1612, %v1611, %v1041
      %vm1645 = vcmask 261120
      %v1647 = vsel %vm1645, %v1614, %v1163
      %v1649 = vsel %vm1645, %v1616, %v1165
      %v1651 = vsel %vm1645, %v1618, %v1167
      %v1653 = vsel %vm1645, %v1620, %v1169
      %v1655 = vsel %vm1645, %v1622, %v1171
      %v1657 = vsel %vm1645, %v1624, %v1173
      %v1659 = vsel %vm1645, %v1626, %v1175
      %v1661 = vsel %vm1645, %v1628, %v1177
      %v1663 = vsel %vm1645, %v1630, %v1179
      %v1665 = vsel %vm1645, %v1632, %v1181
      %v1667 = vsel %vm1645, %v1634, %v1183
      %v1669 = vsel %vm1645, %v1636, %v1185
      %v1671 = vsel %vm1645, %v1638, %v1187
      %v1673 = vsel %vm1645, %v1640, %v1189
      %v1675 = vsel %vm1645, %v1642, %v1191
      %v1677 = vsel %vm1645, %v1644, %v1193
      %vm1678 = vcmask 326656
      %v1680 = vsel %vm1678, %v1647, %v1235
      %v1682 = vsel %vm1678, %v1649, %v1237
      %v1684 = vsel %vm1678, %v1651, %v1239
      %v1686 = vsel %vm1678, %v1653, %v1241
      %v1688 = vsel %vm1678, %v1655, %v1243
      %v1690 = vsel %vm1678, %v1657, %v1245
      %v1692 = vsel %vm1678, %v1659, %v1247
      %v1694 = vsel %vm1678, %v1661, %v1249
      %v1696 = vsel %vm1678, %v1663, %v1251
      %v1698 = vsel %vm1678, %v1665, %v1253
      %v1700 = vsel %vm1678, %v1667, %v1255
      %v1702 = vsel %vm1678, %v1669, %v1257
      %v1704 = vsel %vm1678, %v1671, %v1259
      %v1706 = vsel %vm1678, %v1673, %v1261
      %v1708 = vsel %vm1678, %v1675, %v1263
      %v1710 = vsel %vm1678, %v1677, %v1265
      %vm1711 = vcmask 392192
      %v1713 = vsel %vm1711, %v1680, %v1283
      %v1715 = vsel %vm1711, %v1682, %v1285
      %v1717 = vsel %vm1711, %v1684, %v1287
      %v1719 = vsel %vm1711, %v1686, %v1289
      %v1721 = vsel %vm1711, %v1688, %v1291
      %v1723 = vsel %vm1711, %v1690, %v1293
      %v1725 = vsel %vm1711, %v1692, %v1295
      %v1727 = vsel %vm1711, %v1694, %v1297
      %v1729 = vsel %vm1711, %v1696, %v1299
      %v1731 = vsel %vm1711, %v1698, %v1301
      %v1733 = vsel %vm1711, %v1700, %v1303
      %v1735 = vsel %vm1711, %v1702, %v1305
      %v1737 = vsel %vm1711, %v1704, %v1307
      %v1739 = vsel %vm1711, %v1706, %v1309
      %v1741 = vsel %vm1711, %v1708, %v1311
      %v1743 = vsel %vm1711, %v1710, %v1313
      %vm1744 = vcmask 457728
      %v1746 = vsel %vm1744, %v1713, %v1435
      %v1748 = vsel %vm1744, %v1715, %v1437
      %v1750 = vsel %vm1744, %v1717, %v1439
      %v1752 = vsel %vm1744, %v1719, %v1441
      %v1754 = vsel %vm1744, %v1721, %v1443
      %v1756 = vsel %vm1744, %v1723, %v1445
      %v1758 = vsel %vm1744, %v1725, %v1447
      %v1760 = vsel %vm1744, %v1727, %v1449
      %v1762 = vsel %vm1744, %v1729, %v1451
      %v1764 = vsel %vm1744, %v1731, %v1453
      %v1766 = vsel %vm1744, %v1733, %v1455
      %v1768 = vsel %vm1744, %v1735, %v1457
      %v1770 = vsel %vm1744, %v1737, %v1459
      %v1772 = vsel %vm1744, %v1739, %v1461
      %v1774 = vsel %vm1744, %v1741, %v1463
      %v1776 = vsel %vm1744, %v1743, %v1465
      %vm1777 = vcmask 523264
      %v1779 = vsel %vm1777, %v1746, %v1507
      %v1781 = vsel %vm1777, %v1748, %v1509
      %v1783 = vsel %vm1777, %v1750, %v1511
      %v1785 = vsel %vm1777, %v1752, %v1513
      %v1787 = vsel %vm1777, %v1754, %v1515
      %v1789 = vsel %vm1777, %v1756, %v1517
      %v1791 = vsel %vm1777, %v1758, %v1519
      %v1793 = vsel %vm1777, %v1760, %v1521
      %v1795 = vsel %vm1777, %v1762, %v1523
      %v1797 = vsel %vm1777, %v1764, %v1525
      %v1799 = vsel %vm1777, %v1766, %v1527
      %v1801 = vsel %vm1777, %v1768, %v1529
      %v1803 = vsel %vm1777, %v1770, %v1531
      %v1805 = vsel %vm1777, %v1772, %v1533
      %v1807 = vsel %vm1777, %v1774, %v1535
      %v1809 = vsel %vm1777, %v1776, %v1537
      %vm1810 = vsmask.f32 4352
      %v1811 = vshrl.u32 %v1779, 16
      %v1813 = vrot.slane %v1811, 3
      %v1814 = vshll.u32 %v1779, 16
      %v1816 = vrot.slane %v1814, 4
      %v1817 = vor.u32 %v1813, %v1816
      %v1818 = vshrl.u32 %v1781, 16
      %v1820 = vrot.slane %v1818, 3
      %v1821 = vshll.u32 %v1781, 16
      %v1823 = vrot.slane %v1821, 4
      %v1824 = vor.u32 %v1820, %v1823
      %v1825 = vsel %vm1810, %v1817, %v1824
      %v1826 = vshrl.u32 %v1783, 16
      %v1828 = vrot.slane %v1826, 3
      %v1829 = vshll.u32 %v1783, 16
      %v1831 = vrot.slane %v1829, 4
      %v1832 = vor.u32 %v1828, %v1831
      %v1833 = vshrl.u32 %v1785, 16
      %v1835 = vrot.slane %v1833, 3
      %v1836 = vshll.u32 %v1785, 16
      %v1838 = vrot.slane %v1836, 4
      %v1839 = vor.u32 %v1835, %v1838
      %v1840 = vsel %vm1810, %v1832, %v1839
      %v1841 = vshrl.u32 %v1787, 16
      %v1843 = vrot.slane %v1841, 3
      %v1844 = vshll.u32 %v1787, 16
      %v1846 = vrot.slane %v1844, 4
      %v1847 = vor.u32 %v1843, %v1846
      %v1848 = vshrl.u32 %v1789, 16
      %v1850 = vrot.slane %v1848, 3
      %v1851 = vshll.u32 %v1789, 16
      %v1853 = vrot.slane %v1851, 4
      %v1854 = vor.u32 %v1850, %v1853
      %v1855 = vsel %vm1810, %v1847, %v1854
      %v1856 = vshrl.u32 %v1791, 16
      %v1858 = vrot.slane %v1856, 3
      %v1859 = vshll.u32 %v1791, 16
      %v1861 = vrot.slane %v1859, 4
      %v1862 = vor.u32 %v1858, %v1861
      %v1863 = vshrl.u32 %v1793, 16
      %v1865 = vrot.slane %v1863, 3
      %v1866 = vshll.u32 %v1793, 16
      %v1868 = vrot.slane %v1866, 4
      %v1869 = vor.u32 %v1865, %v1868
      %v1870 = vsel %vm1810, %v1862, %v1869
      %v1871 = vshrl.u32 %v1795, 16
      %v1873 = vrot.slane %v1871, 3
      %v1874 = vshll.u32 %v1795, 16
      %v1876 = vrot.slane %v1874, 4
      %v1877 = vor.u32 %v1873, %v1876
      %v1878 = vshrl.u32 %v1797, 16
      %v1880 = vrot.slane %v1878, 3
      %v1881 = vshll.u32 %v1797, 16
      %v1883 = vrot.slane %v1881, 4
      %v1884 = vor.u32 %v1880, %v1883
      %v1885 = vsel %vm1810, %v1877, %v1884
      %v1886 = vshrl.u32 %v1799, 16
      %v1888 = vrot.slane %v1886, 3
      %v1889 = vshll.u32 %v1799, 16
      %v1891 = vrot.slane %v1889, 4
      %v1892 = vor.u32 %v1888, %v1891
      %v1893 = vshrl.u32 %v1801, 16
      %v1895 = vrot.slane %v1893, 3
      %v1896 = vshll.u32 %v1801, 16
      %v1898 = vrot.slane %v1896, 4
      %v1899 = vor.u32 %v1895, %v1898
      %v1900 = vsel %vm1810, %v1892, %v1899
      %v1901 = vshrl.u32 %v1803, 16
      %v1903 = vrot.slane %v1901, 3
      %v1904 = vshll.u32 %v1803, 16
      %v1906 = vrot.slane %v1904, 4
      %v1907 = vor.u32 %v1903, %v1906
      %v1908 = vshrl.u32 %v1805, 16
      %v1910 = vrot.slane %v1908, 3
      %v1911 = vshll.u32 %v1805, 16
      %v1913 = vrot.slane %v1911, 4
      %v1914 = vor.u32 %v1910, %v1913
      %v1915 = vsel %vm1810, %v1907, %v1914
      %v1916 = vshrl.u32 %v1807, 16
      %v1918 = vrot.slane %v1916, 3
      %v1919 = vshll.u32 %v1807, 16
      %v1921 = vrot.slane %v1919, 4
      %v1922 = vor.u32 %v1918, %v1921
      %v1923 = vshrl.u32 %v1809, 16
      %v1925 = vrot.slane %v1923, 3
      %v1926 = vshll.u32 %v1809, 16
      %v1928 = vrot.slane %v1926, 4
      %v1929 = vor.u32 %v1925, %v1928
      %v1930 = vsel %vm1810, %v1922, %v1929
      %v1931 = vld [vmem:[%s4] sm:$0xf]
      %v1932 = vld [vmem:[%s4 + $0x4] sm:$0xf]
      %v1933 = vld [vmem:[%s4 + $0x8] sm:$0xf]
      %v1934 = vld [vmem:[%s4 + $0xc] sm:$0xf]
      %v1935 = vld [vmem:[%s4 + $0x10] sm:$0xf]
      %v1936 = vld [vmem:[%s4 + $0x14] sm:$0xf]
      %v1937 = vld [vmem:[%s4 + $0x18] sm:$0xf]
      %v1938 = vld [vmem:[%s4 + $0x1c] sm:$0xf]
      %v1939 = vld [vmem:[%s4 + $0x20] sm:$0xf]
      %v1940 = vld [vmem:[%s5] sm:$0x1]
      %v1942 = vlaneseq
      %v1943 = vshrl.u32 %v1942, 7
      %v1944 = vsub.s32 0, %v1943
      %v1945 = vrot.slane %v1940, %v1944
      %v1956 = vunpack.c.l.b16 %v1931
      %v1957 = vunpack.c.l.b16 %v1932
      %v1958 = vunpack.c.l.b16 %v1933
      %v1959 = vunpack.c.l.b16 %v1934
      %v1960 = vunpack.c.l.b16 %v1935
      %v1961 = vunpack.c.l.b16 %v1936
      %v1962 = vunpack.c.l.b16 %v1937
      %v1963 = vunpack.c.l.b16 %v1938
      %v1964 = vunpack.c.l.b16 %v1939
      %v1965 = vpack.c.b16 %v1957, %v1956
      %v1966 = vpack.c.b16 %v1959, %v1958
      %v1967 = vpack.c.b16 %v1961, %v1960
      %v1968 = vpack.c.b16 %v1963, %v1962
      %v1969 = vpack.c.b16 %v1964, %v1964
      %vm1974 = vcmask 588800
      %v1976 = vsel %vm1974, %v1825, 0
      %v1979 = vsel %vm1974, %v1840, 0
      %v1982 = vsel %vm1974, %v1855, 0
      %v1985 = vsel %vm1974, %v1870, 0
      %v1988 = vsel %vm1974, %v1885, 0
      %v1991 = vsel %vm1974, %v1900, 0
      %v1994 = vsel %vm1974, %v1915, 0
      %v1997 = vsel %vm1974, %v1930, 0
      %vm1999 = vcmask 1043456
      %v2001 = vsel %vm1999, %v1969, 0
      %2003 = vmatprep.subr.bf16.mxu0 0
      %2004 = vmatpush1.bf16.msra.mxu0 %v1965
      %2005 = vmatprep.subr.bf16.mxu0 0
      %2006 = vmatpush1.bf16.msra.mxu0 %v1966
      %2007 = vmatprep.subr.bf16.mxu0 0
      %2008 = vmatpush1.bf16.msra.mxu0 %v1967
      %2009 = vmatprep.subr.bf16.mxu0 0
      %2010 = vmatpush1.bf16.msra.mxu0 %v1968
      %2011 = vmatprep.subr.bf16.mxu0 0
      %2012 = vmatpush1.bf16.msra.mxu0 %v2001
      %2013 = vmatprep.subr.bf16.mxu0 0
      %2014 = vmatpush1.bf16.msra.mxu0 0
      %2015 = vmatprep.subr.bf16.mxu0 0
      %2016 = vmatpush1.bf16.msra.mxu0 0
      %2017 = vmatprep.subr.bf16.mxu0 0
      %2018 = vmatpush1.bf16.msra.mxu0 0
      %2019 = vmatprep.subr.bf16.mxu0 0
      %2020 = vmatpush1.bf16.msra.mxu0 0
      %2021 = vmatprep.subr.bf16.mxu0 0
      %2022 = vmatpush1.bf16.msra.mxu0 0
      %2023 = vmatprep.subr.bf16.mxu0 0
      %2024 = vmatpush1.bf16.msra.mxu0 0
      %2025 = vmatprep.subr.bf16.mxu0 0
      %2026 = vmatpush1.bf16.msra.mxu0 0
      %2027 = vmatprep.subr.bf16.mxu0 0
      %2028 = vmatpush1.bf16.msra.mxu0 0
      %2029 = vmatprep.subr.bf16.mxu0 0
      %2030 = vmatpush1.bf16.msra.mxu0 0
      %2031 = vmatprep.subr.bf16.mxu0 0
      %2032 = vmatpush1.bf16.msra.mxu0 0
      %2033 = vmatprep.subr.bf16.mxu0 0
      %2034 = vmatpush1.bf16.msra.mxu0 0
      %2035 = vmatprep.mubr.bf16.mxu0 0
      %2036 = vmatmul.mubr.bf16.gmra.mrb[0].mxu0 %v1976
      %v2037 = vpop.f32.mrb[0].mxu0
      %v2038 = vadd.f32 %v1945, %v2037
      %v2039 = vpop.f32.mrb[0].mxu0
      %v2040 = vpop.f32.mrb[0].mxu0
      %v2041 = vadd.f32 %v1945, %v2040
      %v2042 = vpop.f32.mrb[0].mxu0
      %2043 = vmatprep.mubr.bf16.mxu0 0
      %2044 = vmatmul.mubr.bf16.gmra.mrb[0].mxu0 %v1979
      %v2045 = vpop.f32.mrb[0].mxu0
      %v2046 = vadd.f32 %v1945, %v2045
      %v2047 = vpop.f32.mrb[0].mxu0
      %v2048 = vpop.f32.mrb[0].mxu0
      %v2049 = vadd.f32 %v1945, %v2048
      %v2050 = vpop.f32.mrb[0].mxu0
      %2051 = vmatprep.mubr.bf16.mxu0 0
      %2052 = vmatmul.mubr.bf16.gmra.mrb[0].mxu0 %v1982
      %v2053 = vpop.f32.mrb[0].mxu0
      %v2054 = vadd.f32 %v1945, %v2053
      %v2055 = vpop.f32.mrb[0].mxu0
      %v2056 = vpop.f32.mrb[0].mxu0
      %v2057 = vadd.f32 %v1945, %v2056
      %v2058 = vpop.f32.mrb[0].mxu0
      %2059 = vmatprep.mubr.bf16.mxu0 0
      %2060 = vmatmul.mubr.bf16.gmra.mrb[0].mxu0 %v1985
      %v2061 = vpop.f32.mrb[0].mxu0
      %v2062 = vadd.f32 %v1945, %v2061
      %v2063 = vpop.f32.mrb[0].mxu0
      %v2064 = vpop.f32.mrb[0].mxu0
      %v2065 = vadd.f32 %v1945, %v2064
      %v2066 = vpop.f32.mrb[0].mxu0
      %2067 = vmatprep.mubr.bf16.mxu0 0
      %2068 = vmatmul.mubr.bf16.gmra.mrb[0].mxu0 %v1988
      %v2069 = vpop.f32.mrb[0].mxu0
      %v2070 = vadd.f32 %v1945, %v2069
      %v2071 = vpop.f32.mrb[0].mxu0
      %v2072 = vpop.f32.mrb[0].mxu0
      %v2073 = vadd.f32 %v1945, %v2072
      %v2074 = vpop.f32.mrb[0].mxu0
      %2075 = vmatprep.mubr.bf16.mxu0 0
      %2076 = vmatmul.mubr.bf16.gmra.mrb[0].mxu0 %v1991
      %v2077 = vpop.f32.mrb[0].mxu0
      %v2078 = vadd.f32 %v1945, %v2077
      %v2079 = vpop.f32.mrb[0].mxu0
      %v2080 = vpop.f32.mrb[0].mxu0
      %v2081 = vadd.f32 %v1945, %v2080
      %v2082 = vpop.f32.mrb[0].mxu0
      %2083 = vmatprep.mubr.bf16.mxu0 0
      %2084 = vmatmul.mubr.bf16.gmra.mrb[0].mxu0 %v1994
      %v2085 = vpop.f32.mrb[0].mxu0
      %v2086 = vadd.f32 %v1945, %v2085
      %v2087 = vpop.f32.mrb[0].mxu0
      %v2088 = vpop.f32.mrb[0].mxu0
      %v2089 = vadd.f32 %v1945, %v2088
      %v2090 = vpop.f32.mrb[0].mxu0
      %2091 = vmatprep.mubr.bf16.mxu0 0
      %2092 = vmatmul.mubr.bf16.gmra.mrb[0].mxu0 %v1997
      %v2093 = vpop.f32.mrb[0].mxu0
      %v2094 = vadd.f32 %v1945, %v2093
      %v2095 = vpop.f32.mrb[0].mxu0
      %v2096 = vpop.f32.mrb[0].mxu0
      %v2097 = vadd.f32 %v1945, %v2096
      %v2098 = vpop.f32.mrb[0].mxu0
      %2099 = vdwg.mxu0
      %v2100 = vmax.f32 %v2038, 0.0
      %v2101 = vmax.f32 %v2041, 0.0
      %v2102 = vmax.f32 %v2046, 0.0
      %v2103 = vmax.f32 %v2049, 0.0
      %v2104 = vmax.f32 %v2054, 0.0
      %v2105 = vmax.f32 %v2057, 0.0
      %v2106 = vmax.f32 %v2062, 0.0
      %v2107 = vmax.f32 %v2065, 0.0
      %v2108 = vmax.f32 %v2070, 0.0
      %v2109 = vmax.f32 %v2073, 0.0
      %v2110 = vmax.f32 %v2078, 0.0
      %v2111 = vmax.f32 %v2081, 0.0
      %v2112 = vmax.f32 %v2086, 0.0
      %v2113 = vmax.f32 %v2089, 0.0
      %v2114 = vmax.f32 %v2094, 0.0
      %v2115 = vmax.f32 %v2097, 0.0
      %2116 = vst.msk [vmem:[%s401] sm:$0xff] %vm554, %v2100
      %2117 = vst.msk [vmem:[%s401 + $0x8] sm:$0xff] %vm554, %v2101
      %2118 = vst.msk [vmem:[%s401 + $0x10] sm:$0xff] %vm554, %v2102
      %2119 = vst.msk [vmem:[%s401 + $0x18] sm:$0xff] %vm554, %v2103
      %2120 = vst.msk [vmem:[%s401 + $0x20] sm:$0xff] %vm554, %v2104
      %2121 = vst.msk [vmem:[%s401 + $0x28] sm:$0xff] %vm554, %v2105
      %2122 = vst.msk [vmem:[%s401 + $0x30] sm:$0xff] %vm554, %v2106
      %2123 = vst.msk [vmem:[%s401 + $0x38] sm:$0xff] %vm554, %v2107
      %2124 = vst.msk [vmem:[%s401 + $0x40] sm:$0xff] %vm554, %v2108
      %2125 = vst.msk [vmem:[%s401 + $0x48] sm:$0xff] %vm554, %v2109
      %2126 = vst.msk [vmem:[%s401 + $0x50] sm:$0xff] %vm554, %v2110
      %2127 = vst.msk [vmem:[%s401 + $0x58] sm:$0xff] %vm554, %v2111
      %2128 = vst.msk [vmem:[%s401 + $0x60] sm:$0xff] %vm554, %v2112
      %2129 = vst.msk [vmem:[%s401 + $0x68] sm:$0xff] %vm554, %v2113
      %2130 = vst.msk [vmem:[%s401 + $0x70] sm:$0xff] %vm554, %v2114
      %2131 = vst.msk [vmem:[%s401 + $0x78] sm:$0xff] %vm554, %v2115
      %s2132 = smul.u32 8, %s22
      %p2133 = scmp.lt.s32.totalorder %s21, 1
      %s2134 = scalar_select %p2133, %s21, 1
      %p2135 = scmp.lt.s32.totalorder %s2132, 15
      %s2136 = scalar_select %p2135, %s2132, 15
      %s2137 = smul.addr %s2136, 2
      %s2138 = smul.addr %s2134, 32
      %s2139 = sadd.s32 %s2137, %s2138
      %s2140 = smul.addr %s2139, 8
      %s2141 = scalar_lea.vmem %s6, %s2140
      // Predicated region
      $region45: #{decoder_forward.3} parent=43 // pred_check
        %p2142 = pneg %p203
      $region46: #{decoder_forward.3} parent=43 // pred_check_branch
        %2144 = sbr.rel (%p2142) target = $region48
      $region47: #{decoder_forward.3} parent=43 // pred_region
        %s2145 = smul.u32 8, %s22
      $region48: #{decoder_forward.3} parent=43 // pred_fallthru
        _
    $region44: #{decoder_forward.3} parent=5 // pred_fallthru
      _
    %p2146 = scmp.le.s32.totalorder 2, %s12
    // Predicated region
    $region49: #{decoder_forward.3} parent=5 // pred_check
      %p2147 = pneg %p2146
    $region50: #{decoder_forward.3} parent=5 // pred_check_branch
      %2149 = sbr.rel (%p2147) target = $region52
    $region51: #{decoder_forward.3} parent=5 // pred_region
      %s2150 = ssub.s32 %s12, 2
      // Predicated region
      $region53: #{decoder_forward.3} parent=51 // pred_check
        %p2151 = pneg %p209
      $region54: #{decoder_forward.3} parent=51 // pred_check_branch
        %2153 = sbr.rel (%p2151) target = $region56
      $region55: #{decoder_forward.3} parent=51 // pred_region
        %s2154 = smul.u32 8, %s24
        %p2155 = scmp.lt.s32.totalorder %s23, 1
        %s2156 = scalar_select %p2155, %s23, 1
        %p2157 = scmp.lt.s32.totalorder %s2154, 15
        %s2158 = scalar_select %p2157, %s2154, 15
        %s2159 = smul.addr %s2158, 2
        %s2160 = smul.addr %s2156, 32
        %s2161 = sadd.s32 %s2159, %s2160
        %s2162 = smul.addr %s2161, 8
        %s2163 = scalar_lea.vmem %s6, %s2162
      $region56: #{decoder_forward.3} parent=51 // pred_fallthru
        _
    $region52: #{decoder_forward.3} parent=5 // pred_fallthru
      _
  $region6: #{decoder_forward.3} parent=0 // loop_footer
    %s16 = sadd.s32 1, %s12
  $region7: #{decoder_forward.3} parent=0 // loop_footer_branch
    %11 = sbr.rel target = $region3
  $region8: #{decoder_forward.3} parent=0 // loop_exit
    _

</llo_original>
